<compile_context>
chip_gen: v7x
topology: tpu7x:2x2x1
jax: 0.10.0
libtpu: 0.0.40
codegen_flags: <defaults>
</compile_context>

<pallas_src>
import jax
import jax.numpy as jnp
from jax import lax
from jax.experimental import pallas as pl
from jax.experimental.pallas import tpu as pltpu

D_MODEL = 32
MAXLEN = 8
VPAD = 16                               # each vocab (11, 11, 10, 10) padded to 16 rows
NUM_TABLES = 4
TOKENS_PER_ROW = 4                      # 4 tokens * d_model(32) = 128 lanes per row
LANES = TOKENS_PER_ROW * D_MODEL        # 128
K_ONEHOT = TOKENS_PER_ROW * NUM_TABLES * VPAD   # 256-wide one-hot / table rows
EPS = 1e-5                              # nn.LayerNorm default eps


def embedding_ln_kernel(ids_ref, table_ref, gb_ref, out_ref):
    """ids_ref   : (TR, 4)   int32 -- 4 tokens per row; each int32 byte-packs that
                                      token's 4 ids (Type|Color<<8|Num<<16|Dup<<24).
       table_ref : (256, 128) f32  -- block-diagonal fused table: token slot t uses
                                      rows [64t, 64t+64) and lanes [32t, 32t+32).
       gb_ref    : (2, 128)   f32  -- row 0 = gamma tiled 4x, row 1 = beta tiled 4x.
       out_ref   : (TR, 128)  f32  -- 4 normalized token embeddings per row.
    """
    tr = out_ref.shape[0]

    # Rebuild the (TR, 256) one-hot from the packed ids (VPU shifts/compares only).
    lane = lax.broadcasted_iota(jnp.int32, (tr, K_ONEHOT), 1)
    seg = (lane >> 4) & 3                 # which sub-table (Type/Color/Num/Duplicate)
    within = lane & 15                    # row within the 16-row padded vocab segment
    p = ids_ref[...]                      # (TR, 4) int32 -- one packed word per token
    word = jnp.where(lane < 64, p[:, 0:1],
           jnp.where(lane < 128, p[:, 1:2],
           jnp.where(lane < 192, p[:, 2:3], p[:, 3:4])))
    ids = (word >> (seg << 3)) & 0xFF
    onehot = (ids == within).astype(jnp.float32)          # 16 ones per row

    # All four gathers + their sum, for 4 tokens at once, in one MXU matmul.
    emb = jnp.dot(onehot, table_ref[...],
                  precision=lax.Precision.HIGHEST,
                  preferred_element_type=jnp.float32)     # (TR, 128)

    # Segmented LayerNorm over each token's 32-lane group. The cross-lane reductions
    # ride the (idle) MXU via a block-diagonal ones matrix instead of XLU reduces.
    ri = lax.broadcasted_iota(jnp.int32, (LANES, LANES), 0) >> 5
    rj = lax.broadcasted_iota(jnp.int32, (LANES, LANES), 1) >> 5
    seg_ones = (ri == rj).astype(jnp.float32)             # (128, 128) block-diag ones

    mean = jnp.dot(emb, seg_ones, precision=lax.Precision.HIGHEST,
                   preferred_element_type=jnp.float32) * (1.0 / D_MODEL)
    centered = emb - mean
    var = jnp.dot(centered * centered, seg_ones,
                  precision=lax.Precision.HIGHEST,
                  preferred_element_type=jnp.float32) * (1.0 / D_MODEL)
    inv = lax.rsqrt(var + EPS)
    out_ref[...] = centered * inv * gb_ref[0:1, :] + gb_ref[1:2, :]


def pack_params(w_type, w_color, w_num, w_dup, gamma, beta):
    """Build the fused block-diagonal table and tiled gamma/beta ONCE at param init
    (hoisted out of the per-call wrapper)."""
    def pad16(w):
        return jnp.pad(w.astype(jnp.float32), ((0, VPAD - w.shape[0]), (0, 0)))

    fused = jnp.concatenate(
        [pad16(w) for w in (w_type, w_color, w_num, w_dup)], axis=0)      # (64, d)
    # Block-diagonal placement: token slot t -> rows [64t,64t+64), lanes [32t,32t+32).
    table_bd = jnp.kron(jnp.eye(TOKENS_PER_ROW, dtype=jnp.float32), fused)  # (256, 128)
    gb = jnp.stack([jnp.tile(gamma.astype(jnp.float32), TOKENS_PER_ROW),
                    jnp.tile(beta.astype(jnp.float32), TOKENS_PER_ROW)], 0)  # (2, 128)
    return table_bd, gb


def embedding_forward(x, table_bd, gb, *, tn=1024):
    """x: (B, L, 4) integer indices -> (B, L, d_model) float32.
    `tn` is the tile in PACKED ROWS (4 tokens each); default 1024 rows = 4096 tokens."""
    B, L, _ = x.shape
    d = D_MODEL
    n = B * L

    # Byte-pack the 4 ids of each token into a single int32: 4 B/token kernel input.
    xi = x.reshape(n, NUM_TABLES).astype(jnp.int32)
    packed = (xi[:, 0] | (xi[:, 1] << 8) | (xi[:, 2] << 16) | (xi[:, 3] << 24))  # (n,)

    # Tile selection: big tiles amortize the ~0.35us/step overhead; cap so that at
    # scale there are >=2 grid steps (both v7x TensorCores get work).
    rows = pl.cdiv(n, TOKENS_PER_ROW)
    half = ((pl.cdiv(rows, 2) + 7) // 8) * 8
    tile = max(8, min(tn, half))
    r_pad = pl.cdiv(rows, tile) * tile

    # Padding tokens are all-zero ids -> zero embedding -> LayerNorm(0)=beta, sliced off.
    packed = jnp.pad(packed, (0, r_pad * TOKENS_PER_ROW - n))
    ids = packed.reshape(r_pad, TOKENS_PER_ROW)                            # (r_pad, 4)

    out = pl.pallas_call(
        embedding_ln_kernel,
        out_shape=jax.ShapeDtypeStruct((r_pad, LANES), jnp.float32),
        grid=(r_pad // tile,),
        in_specs=[pl.BlockSpec((tile, TOKENS_PER_ROW), lambda i: (i, 0)),
                  pl.BlockSpec((K_ONEHOT, LANES), lambda i: (0, 0)),
                  pl.BlockSpec((2, LANES), lambda i: (0, 0))],
        out_specs=pl.BlockSpec((tile, LANES), lambda i: (i, 0)),
        compiler_params=pltpu.CompilerParams(
            dimension_semantics=("parallel",)),
    )(ids, table_bd, gb)

    # (r_pad, 128) -> (r_pad*4, 32) is a free row-major reshape; slice off padding.
    return out.reshape(r_pad * TOKENS_PER_ROW, d)[:n].reshape(B, L, d)


if __name__ == "__main__":
    key = jax.random.PRNGKey(0)
    k1, k2, k3, k4, k5, k6, k7, k8, k9, k10 = jax.random.split(key, 10)
    d = D_MODEL
    B, L = 2, MAXLEN

    # nn.Embedding: N(0,1) with padding row 0 zeroed; nontrivial gamma/beta so the
    # affine path is exercised.
    def make_table(k, vocab):
        w = jax.random.normal(k, (vocab, d), jnp.float32)
        return w.at[0].set(0.0)

    w_type = make_table(k1, 11)
    w_color = make_table(k2, 11)
    w_num = make_table(k3, 10)
    w_dup = make_table(k4, 10)
    gamma = jax.random.normal(k7, (d,), jnp.float32)
    beta = jax.random.normal(k8, (d,), jnp.float32)

    # Built once at init (hoisted out of the forward pass).
    table_bd, gb = pack_params(w_type, w_color, w_num, w_dup, gamma, beta)

    def ref_fn(x):
        emb = (w_type[x[:, :, 0]] + w_color[x[:, :, 1]]
               + w_num[x[:, :, 2]] + w_dup[x[:, :, 3]])
        mean = emb.mean(-1, keepdims=True)
        var = ((emb - mean) ** 2).mean(-1, keepdims=True)
        return (emb - mean) * lax.rsqrt(var + EPS) * gamma + beta

    # Module-sized input: x[:, :, 0:2] in [0, 11), x[:, :, 2:4] in [0, 10).
    idx_tc = jax.random.randint(k5, (B, L, 2), 0, 11, jnp.int32)
    idx_nd = jax.random.randint(k6, (B, L, 2), 0, 10, jnp.int32)
    x = jnp.concatenate([idx_tc, idx_nd], axis=-1)
    out = jax.block_until_ready(embedding_forward(x, table_bd, gb))
    assert out.shape == (B, L, d)
    assert jnp.allclose(out, ref_fn(x), atol=1e-4, rtol=1e-4)

    # Larger input with a small tile to exercise the multi-step token-tiled grid path.
    B2, L2 = 64, MAXLEN
    idx_tc2 = jax.random.randint(k9, (B2, L2, 2), 0, 11, jnp.int32)
    idx_nd2 = jax.random.randint(k10, (B2, L2, 2), 0, 10, jnp.int32)
    x2 = jnp.concatenate([idx_tc2, idx_nd2], axis=-1)
    out2 = jax.block_until_ready(embedding_forward(x2, table_bd, gb, tn=32))
    assert out2.shape == (B2, L2, d)
    assert jnp.allclose(out2, ref_fn(x2), atol=1e-4, rtol=1e-4)

    print("KERNEL_OK")
</pallas_src>

<mosaic_0001>
module attributes {stable_mosaic.version = 11 : i64} {
  func.func @embedding_ln_kernel(%arg0: i32, %arg1: memref<8x4xi32, #tpu.memory_space<vmem>>, %arg2: memref<256x128xf32, #tpu.memory_space<vmem>>, %arg3: memref<2x128xf32, #tpu.memory_space<vmem>>, %arg4: memref<8x128xf32, #tpu.memory_space<vmem>>) attributes {dimension_semantics = [#tpu.dimension_semantics<parallel>], iteration_bounds = array<i64: 1>, scalar_prefetch = 0 : i64, scratch_operands = 0 : i64, tpu.core_type = #tpu.core_type<tc>, window_params = [{transform_indices = @transform_0, window_bounds = array<i64: 8, 4>}, {pipeline_mode = #tpu.pipeline_mode<synchronous>, transform_indices = @transform_1, window_bounds = array<i64: 256, 128>}, {pipeline_mode = #tpu.pipeline_mode<synchronous>, transform_indices = @transform_2, window_bounds = array<i64: 2, 128>}, {transform_indices = @transform_3, window_bounds = array<i64: 8, 128>}]} {
    %0 = tpu.iota {dimensions = array<i32: 1>} : vector<8x256xi32>
    %c4_i32 = arith.constant 4 : i32
    %1 = vector.broadcast %c4_i32 : i32 to vector<8x256xi32>
    %2 = arith.shrsi %0, %1 : vector<8x256xi32>
    %c3_i32 = arith.constant 3 : i32
    %3 = vector.broadcast %c3_i32 : i32 to vector<8x256xi32>
    %4 = arith.andi %2, %3 : vector<8x256xi32>
    %c15_i32 = arith.constant 15 : i32
    %5 = vector.broadcast %c15_i32 : i32 to vector<8x256xi32>
    %6 = arith.andi %0, %5 : vector<8x256xi32>
    %c0 = arith.constant 0 : index
    %c0_0 = arith.constant 0 : index
    %7 = vector.load %arg1[%c0, %c0_0] : memref<8x4xi32, #tpu.memory_space<vmem>>, vector<8x4xi32>
    %c64_i32 = arith.constant 64 : i32
    %8 = vector.broadcast %c64_i32 : i32 to vector<8x256xi32>
    %9 = arith.cmpi slt, %0, %8 : vector<8x256xi32>
    %10 = vector.extract_strided_slice %7 {offsets = [0, 0], sizes = [8, 1], strides = [1, 1]} : vector<8x4xi32> to vector<8x1xi32>
    %c128_i32 = arith.constant 128 : i32
    %11 = vector.broadcast %c128_i32 : i32 to vector<8x256xi32>
    %12 = arith.cmpi slt, %0, %11 : vector<8x256xi32>
    %13 = vector.extract_strided_slice %7 {offsets = [0, 1], sizes = [8, 1], strides = [1, 1]} : vector<8x4xi32> to vector<8x1xi32>
    %c192_i32 = arith.constant 192 : i32
    %14 = vector.broadcast %c192_i32 : i32 to vector<8x256xi32>
    %15 = arith.cmpi slt, %0, %14 : vector<8x256xi32>
    %16 = vector.extract_strided_slice %7 {offsets = [0, 2], sizes = [8, 1], strides = [1, 1]} : vector<8x4xi32> to vector<8x1xi32>
    %17 = vector.extract_strided_slice %7 {offsets = [0, 3], sizes = [8, 1], strides = [1, 1]} : vector<8x4xi32> to vector<8x1xi32>
    %18 = vector.shape_cast %16 : vector<8x1xi32> to vector<8x1xi32>
    %19 = vector.broadcast %18 : vector<8x1xi32> to vector<8x256xi32>
    %20 = vector.shape_cast %17 : vector<8x1xi32> to vector<8x1xi32>
    %21 = vector.broadcast %20 : vector<8x1xi32> to vector<8x256xi32>
    %22 = arith.select %15, %19, %21 : vector<8x256xi1>, vector<8x256xi32>
    %23 = vector.shape_cast %13 : vector<8x1xi32> to vector<8x1xi32>
    %24 = vector.broadcast %23 : vector<8x1xi32> to vector<8x256xi32>
    %25 = arith.select %12, %24, %22 : vector<8x256xi1>, vector<8x256xi32>
    %26 = vector.shape_cast %10 : vector<8x1xi32> to vector<8x1xi32>
    %27 = vector.broadcast %26 : vector<8x1xi32> to vector<8x256xi32>
    %28 = arith.select %9, %27, %25 : vector<8x256xi1>, vector<8x256xi32>
    %c3_i32_1 = arith.constant 3 : i32
    %29 = vector.broadcast %c3_i32_1 : i32 to vector<8x256xi32>
    %30 = arith.shli %4, %29 : vector<8x256xi32>
    %31 = arith.shrsi %28, %30 : vector<8x256xi32>
    %c255_i32 = arith.constant 255 : i32
    %32 = vector.broadcast %c255_i32 : i32 to vector<8x256xi32>
    %33 = arith.andi %31, %32 : vector<8x256xi32>
    %34 = arith.cmpi eq, %33, %6 : vector<8x256xi32>
    %35 = arith.extui %34 : vector<8x256xi1> to vector<8x256xi32>
    %36 = arith.sitofp %35 : vector<8x256xi32> to vector<8x256xf32>
    %c0_2 = arith.constant 0 : index
    %c0_3 = arith.constant 0 : index
    %37 = vector.load %arg2[%c0_2, %c0_3] : memref<256x128xf32, #tpu.memory_space<vmem>>, vector<256x128xf32>
    %cst = arith.constant dense<0.000000e+00> : vector<8x128xf32>
    %38 = tpu.matmul %36, %37, %cst {dimension_numbers = #tpu.dot_dimension_numbers<[1], [0], [0], [1], [0, 0, 1, 1], [], []>, precision = #tpu.contract_precision<fp32>} : vector<8x256xf32>, vector<256x128xf32>, vector<8x128xf32> -> vector<8x128xf32>
    %39 = tpu.iota {dimensions = array<i32: 0>} : vector<128x128xi32>
    %c5_i32 = arith.constant 5 : i32
    %40 = vector.broadcast %c5_i32 : i32 to vector<128x128xi32>
    %41 = arith.shrsi %39, %40 : vector<128x128xi32>
    %42 = tpu.iota {dimensions = array<i32: 1>} : vector<128x128xi32>
    %c5_i32_4 = arith.constant 5 : i32
    %43 = vector.broadcast %c5_i32_4 : i32 to vector<128x128xi32>
    %44 = arith.shrsi %42, %43 : vector<128x128xi32>
    %45 = arith.cmpi eq, %41, %44 : vector<128x128xi32>
    %46 = arith.extui %45 : vector<128x128xi1> to vector<128x128xi32>
    %47 = arith.sitofp %46 : vector<128x128xi32> to vector<128x128xf32>
    %cst_5 = arith.constant dense<0.000000e+00> : vector<8x128xf32>
    %48 = tpu.matmul %38, %47, %cst_5 {dimension_numbers = #tpu.dot_dimension_numbers<[1], [0], [0], [1], [0, 0, 1, 1], [], []>, precision = #tpu.contract_precision<fp32>} : vector<8x128xf32>, vector<128x128xf32>, vector<8x128xf32> -> vector<8x128xf32>
    %cst_6 = arith.constant 3.125000e-02 : f32
    %49 = vector.broadcast %cst_6 : f32 to vector<8x128xf32>
    %50 = arith.mulf %48, %49 : vector<8x128xf32>
    %51 = arith.subf %38, %50 : vector<8x128xf32>
    %52 = arith.mulf %51, %51 : vector<8x128xf32>
    %cst_7 = arith.constant dense<0.000000e+00> : vector<8x128xf32>
    %53 = tpu.matmul %52, %47, %cst_7 {dimension_numbers = #tpu.dot_dimension_numbers<[1], [0], [0], [1], [0, 0, 1, 1], [], []>, precision = #tpu.contract_precision<fp32>} : vector<8x128xf32>, vector<128x128xf32>, vector<8x128xf32> -> vector<8x128xf32>
    %cst_8 = arith.constant 3.125000e-02 : f32
    %54 = vector.broadcast %cst_8 : f32 to vector<8x128xf32>
    %55 = arith.mulf %53, %54 : vector<8x128xf32>
    %cst_9 = arith.constant 9.99999974E-6 : f32
    %56 = vector.broadcast %cst_9 : f32 to vector<8x128xf32>
    %57 = arith.addf %55, %56 : vector<8x128xf32>
    %58 = math.rsqrt %57 : vector<8x128xf32>
    %59 = arith.mulf %51, %58 : vector<8x128xf32>
    %c0_10 = arith.constant 0 : index
    %c0_11 = arith.constant 0 : index
    %60 = vector.load %arg3[%c0_10, %c0_11] : memref<2x128xf32, #tpu.memory_space<vmem>>, vector<1x128xf32>
    %61 = vector.broadcast %60 : vector<1x128xf32> to vector<8x128xf32>
    %62 = arith.mulf %59, %61 : vector<8x128xf32>
    %c1 = arith.constant 1 : index
    %c0_12 = arith.constant 0 : index
    %63 = vector.load %arg3[%c1, %c0_12] : memref<2x128xf32, #tpu.memory_space<vmem>>, vector<1x128xf32>
    %64 = vector.broadcast %63 : vector<1x128xf32> to vector<8x128xf32>
    %65 = arith.addf %62, %64 : vector<8x128xf32>
    %c0_13 = arith.constant 0 : index
    %c0_14 = arith.constant 0 : index
    %66 = vector.load %arg4[%c0_13, %c0_14] : memref<8x128xf32, #tpu.memory_space<vmem>>, vector<8x128xf32>
    tpu.vector_store %arg4[%c0_13, %c0_14], %65 {strides = array<i32>} : memref<8x128xf32, #tpu.memory_space<vmem>>, vector<8x128xf32>,
    return
  }
  func.func @transform_0(%arg0: i32) -> (i32, i32) {
    %c0_i32 = arith.constant 0 : i32
    %c0_i32_0 = arith.constant 0 : i32
    return %arg0, %c0_i32 : i32, i32
  }
  func.func @transform_1(%arg0: i32) -> (i32, i32) {
    %c0_i32 = arith.constant 0 : i32
    %c0_i32_0 = arith.constant 0 : i32
    %c0_i32_1 = arith.constant 0 : i32
    return %c0_i32, %c0_i32_0 : i32, i32
  }
  func.func @transform_2(%arg0: i32) -> (i32, i32) {
    %c0_i32 = arith.constant 0 : i32
    %c0_i32_0 = arith.constant 0 : i32
    %c0_i32_1 = arith.constant 0 : i32
    return %c0_i32, %c0_i32_0 : i32, i32
  }
  func.func @transform_3(%arg0: i32) -> (i32, i32) {
    %c0_i32 = arith.constant 0 : i32
    %c0_i32_0 = arith.constant 0 : i32
    return %arg0, %c0_i32 : i32, i32
  }
}

</mosaic_0001>

<llo_original>
// kernel: tpu_custom_call.1
$region0: #{tpu_custom_call.1}
  #allocation0 [shape = 'u32[]', space=smem, size = 0x4, offset = 0x4, fixed_abs, tag = 'smem constant byte address 0x4 - core index']
  #allocation1 [shape = 'u32[144,128]{1,0:T(1,128)}', space=vmem, size = 0x12000, scoped, tag = 'internal scratch']
  %s0 = inlined_call_operand.vmem [shape: s32[8,4], index: 0, kind: input, shape index: {}]
  %s1 = inlined_call_operand.hbm [shape: f32[256,128], index: 1, kind: input, shape index: {}]
  %s2 = inlined_call_operand.vmem [shape: f32[2,128], index: 2, kind: input, shape index: {}]
  %s3 = inlined_call_operand.hbm [shape: f32[8,128], index: 3, kind: output, shape index: {}]
  %s4 = sld [smem:[#allocation0]]
  $region26: #{tpu_custom_call.1} parent=0
    _
  %s6 = ssub.s32 1, %s4
  %s7 = scalar_select 0, %s6, %s4
  $region1: #{tpu_custom_call.1} parent=0
    #allocation2 [shape = 'u8[131072]{0}', space=vmem, size = 0x20000, scoped, tag = 'input window, operand 1, single buffered']
    #allocation3 [shape = 's32[1]{0}', space=sflag, size = 0x4, scoped, tag = 'scoped memory for tpu_custom_call.1']
    #allocation4 [shape = 's32[1]{0}', space=sflag, size = 0x4, scoped, tag = 'scoped memory for tpu_custom_call.1']
    #allocation5 [shape = 'u8[4096]{0}', space=vmem, size = 0x1000, scoped, tag = 'output window, operand 0, single buffered']
    %8 = vsyncpa [#allocation3], 0
    %9 = vsyncpa [#allocation4], 0
    // Predicated region
    $region2: #{tpu_custom_call.1} parent=1 // pred_check
      _
    $region3: #{tpu_custom_call.1} parent=1 // pred_check_branch
      %11 = sbr.rel (0) target = $region5
    $region4: #{tpu_custom_call.1} parent=1 // pred_region
      _
    $region5: #{tpu_custom_call.1} parent=1 // pred_fallthru
      _
    // Predicated region
    $region6: #{tpu_custom_call.1} parent=1 // pred_check
      _
    $region7: #{tpu_custom_call.1} parent=1 // pred_check_branch
      %13 = sbr.rel (0) target = $region9
    $region8: #{tpu_custom_call.1} parent=1 // pred_region
      %s15 = ssub.s32 4096, 4096
      %16 = vsyncadd [#allocation3], %s15
      %s17 = sshll.u32 [#allocation2], 4
      %s18 = int_to_ptr.vmem [resolvable:$true] %s17
      %23 = dma.hbm_to_vmem [thread:$0]  %s1, 4096, %s18, [#allocation3], 128, 128, 8
    $region9: #{tpu_custom_call.1} parent=1 // pred_fallthru
      _
    // Predicated region
    $region10: #{tpu_custom_call.1} parent=1 // pred_check
      _
    $region11: #{tpu_custom_call.1} parent=1 // pred_check_branch
      %25 = sbr.rel (0) target = $region13
    $region12: #{tpu_custom_call.1} parent=1 // pred_region
      _
    $region13: #{tpu_custom_call.1} parent=1 // pred_fallthru
      _
    // Predicated region
    $region14: #{tpu_custom_call.1} parent=1 // pred_check
      _
    $region15: #{tpu_custom_call.1} parent=1 // pred_check_branch
      %27 = sbr.rel (0) target = $region17
    $region16: #{tpu_custom_call.1} parent=1 // pred_region
      %28 = dma.done [#allocation3], 4096
    $region17: #{tpu_custom_call.1} parent=1 // pred_fallthru
      _
    %v29 = vlaneseq
    %v30 = vand.u32 %v29, 127
    %v31 = vadd.s32 %v30, 128
    %v32 = vshra.s32 %v30, 4
    %v33 = vshra.s32 %v31, 4
    %v34 = vand.u32 %v32, 3
    %v35 = vand.u32 %v33, 3
    %v36 = vand.u32 %v30, 15
    %v37 = vand.u32 %v31, 15
    %v38 = vld [vmem:[%s0] sm:$0xff]
    %vm39 = vcmp.lt.s32.totalorder %v30, 64
    %vm40 = vcmp.lt.s32.totalorder %v31, 64
    %vm41 = vcmp.lt.s32.totalorder %v30, 128
    %vm42 = vcmp.lt.s32.totalorder %v31, 128
    %vm43 = vcmp.lt.s32.totalorder %v30, 192
    %vm44 = vcmp.lt.s32.totalorder %v31, 192
    %45 = vset.pattern.permute.xlu0 2
    %46 = vperm.xlu0 %45, %v38
    %v47 = vpop.permute.xlu0 %46
    %48 = vset.pattern.permute.xlu0 3
    %49 = vperm.xlu0 %48, %v38
    %v50 = vpop.permute.xlu0 %49
    %v51 = vsel %vm43, %v47, %v50
    %v52 = vsel %vm44, %v47, %v50
    %53 = vset.pattern.permute.xlu0 1
    %54 = vperm.xlu0 %53, %v38
    %v55 = vpop.permute.xlu0 %54
    %v56 = vsel %vm41, %v55, %v51
    %v57 = vsel %vm42, %v55, %v52
    %58 = vset.pattern.permute.xlu0 0
    %59 = vperm.xlu0 %58, %v38
    %v60 = vpop.permute.xlu0 %59
    %v61 = vsel %vm39, %v60, %v56
    %v62 = vsel %vm40, %v60, %v57
    %v63 = vshll.u32 %v34, 3
    %v64 = vshll.u32 %v35, 3
    %v65 = vshra.s32 %v61, %v63
    %v66 = vshra.s32 %v62, %v64
    %v67 = vand.u32 %v65, 255
    %v68 = vand.u32 %v66, 255
    %vm69 = vcmp.eq.s32.totalorder %v67, %v36
    %vm70 = vcmp.eq.s32.totalorder %v68, %v37
    %v71 = vsel %vm69, 1, 0
    %v72 = vsel %vm70, 1, 0
    %v73 = vcvt.s32.f32 %v71
    %v74 = vcvt.s32.f32 %v72
    %v75 = vld [vmem:[#allocation2] sm:$0xff]
    %v76 = vld [vmem:[#allocation2 + $0x8] sm:$0xff]
    %v77 = vld [vmem:[#allocation2 + $0x10] sm:$0xff]
    %v78 = vld [vmem:[#allocation2 + $0x18] sm:$0xff]
    %v79 = vld [vmem:[#allocation2 + $0x20] sm:$0xff]
    %v80 = vld [vmem:[#allocation2 + $0x28] sm:$0xff]
    %v81 = vld [vmem:[#allocation2 + $0x30] sm:$0xff]
    %v82 = vld [vmem:[#allocation2 + $0x38] sm:$0xff]
    %v83 = vld [vmem:[#allocation2 + $0x40] sm:$0xff]
    %v84 = vld [vmem:[#allocation2 + $0x48] sm:$0xff]
    %v85 = vld [vmem:[#allocation2 + $0x50] sm:$0xff]
    %v86 = vld [vmem:[#allocation2 + $0x58] sm:$0xff]
    %v87 = vld [vmem:[#allocation2 + $0x60] sm:$0xff]
    %v88 = vld [vmem:[#allocation2 + $0x68] sm:$0xff]
    %v89 = vld [vmem:[#allocation2 + $0x70] sm:$0xff]
    %v90 = vld [vmem:[#allocation2 + $0x78] sm:$0xff]
    %v91 = vld [vmem:[#allocation2 + $0x80] sm:$0xff]
    %v92 = vld [vmem:[#allocation2 + $0x88] sm:$0xff]
    %v93 = vld [vmem:[#allocation2 + $0x90] sm:$0xff]
    %v94 = vld [vmem:[#allocation2 + $0x98] sm:$0xff]
    %v95 = vld [vmem:[#allocation2 + $0xa0] sm:$0xff]
    %v96 = vld [vmem:[#allocation2 + $0xa8] sm:$0xff]
    %v97 = vld [vmem:[#allocation2 + $0xb0] sm:$0xff]
    %v98 = vld [vmem:[#allocation2 + $0xb8] sm:$0xff]
    %v99 = vld [vmem:[#allocation2 + $0xc0] sm:$0xff]
    %v100 = vld [vmem:[#allocation2 + $0xc8] sm:$0xff]
    %v101 = vld [vmem:[#allocation2 + $0xd0] sm:$0xff]
    %v102 = vld [vmem:[#allocation2 + $0xd8] sm:$0xff]
    %v103 = vld [vmem:[#allocation2 + $0xe0] sm:$0xff]
    %v104 = vld [vmem:[#allocation2 + $0xe8] sm:$0xff]
    %v105 = vld [vmem:[#allocation2 + $0xf0] sm:$0xff]
    %v106 = vld [vmem:[#allocation2 + $0xf8] sm:$0xff]
    %107 = vmatprep.subr.mxu0 0.0
    %v108 = vand.u32 %v75, 4294901760
    %109 = vmatpush1.msra.mxu0 %v108
    %110 = vmatprep.subr.mxu0 0.0
    %v111 = vand.u32 %v76, 4294901760
    %112 = vmatpush1.msra.mxu0 %v111
    %113 = vmatprep.subr.mxu0 0.0
    %v114 = vand.u32 %v77, 4294901760
    %115 = vmatpush1.msra.mxu0 %v114
    %116 = vmatprep.subr.mxu0 0.0
    %v117 = vand.u32 %v78, 4294901760
    %118 = vmatpush1.msra.mxu0 %v117
    %119 = vmatprep.subr.mxu0 0.0
    %v120 = vand.u32 %v79, 4294901760
    %121 = vmatpush1.msra.mxu0 %v120
    %122 = vmatprep.subr.mxu0 0.0
    %v123 = vand.u32 %v80, 4294901760
    %124 = vmatpush1.msra.mxu0 %v123
    %125 = vmatprep.subr.mxu0 0.0
    %v126 = vand.u32 %v81, 4294901760
    %127 = vmatpush1.msra.mxu0 %v126
    %128 = vmatprep.subr.mxu0 0.0
    %v129 = vand.u32 %v82, 4294901760
    %130 = vmatpush1.msra.mxu0 %v129
    %131 = vmatprep.subr.mxu0 0.0
    %v132 = vand.u32 %v83, 4294901760
    %133 = vmatpush1.msra.mxu0 %v132
    %134 = vmatprep.subr.mxu0 0.0
    %v135 = vand.u32 %v84, 4294901760
    %136 = vmatpush1.msra.mxu0 %v135
    %137 = vmatprep.subr.mxu0 0.0
    %v138 = vand.u32 %v85, 4294901760
    %139 = vmatpush1.msra.mxu0 %v138
    %140 = vmatprep.subr.mxu0 0.0
    %v141 = vand.u32 %v86, 4294901760
    %142 = vmatpush1.msra.mxu0 %v141
    %143 = vmatprep.subr.mxu0 0.0
    %v144 = vand.u32 %v87, 4294901760
    %145 = vmatpush1.msra.mxu0 %v144
    %146 = vmatprep.subr.mxu0 0.0
    %v147 = vand.u32 %v88, 4294901760
    %148 = vmatpush1.msra.mxu0 %v147
    %149 = vmatprep.subr.mxu0 0.0
    %v150 = vand.u32 %v89, 4294901760
    %151 = vmatpush1.msra.mxu0 %v150
    %152 = vmatprep.subr.mxu0 0.0
    %v153 = vand.u32 %v90, 4294901760
    %154 = vmatpush1.msra.mxu0 %v153
    %155 = vmatprep.subr.mxu0 0.0
    %v156 = vand.u32 %v91, 4294901760
    %157 = vmatpush1.msra.mxu0 %v156
    %158 = vmatprep.subr.mxu0 0.0
    %v159 = vand.u32 %v92, 4294901760
    %160 = vmatpush1.msra.mxu0 %v159
    %161 = vmatprep.subr.mxu0 0.0
    %v162 = vand.u32 %v93, 4294901760
    %163 = vmatpush1.msra.mxu0 %v162
    %164 = vmatprep.subr.mxu0 0.0
    %v165 = vand.u32 %v94, 4294901760
    %166 = vmatpush1.msra.mxu0 %v165
    %167 = vmatprep.subr.mxu0 0.0
    %v168 = vand.u32 %v95, 4294901760
    %169 = vmatpush1.msra.mxu0 %v168
    %170 = vmatprep.subr.mxu0 0.0
    %v171 = vand.u32 %v96, 4294901760
    %172 = vmatpush1.msra.mxu0 %v171
    %173 = vmatprep.subr.mxu0 0.0
    %v174 = vand.u32 %v97, 4294901760
    %175 = vmatpush1.msra.mxu0 %v174
    %176 = vmatprep.subr.mxu0 0.0
    %v177 = vand.u32 %v98, 4294901760
    %178 = vmatpush1.msra.mxu0 %v177
    %179 = vmatprep.subr.mxu0 0.0
    %v180 = vand.u32 %v99, 4294901760
    %181 = vmatpush1.msra.mxu0 %v180
    %182 = vmatprep.subr.mxu0 0.0
    %v183 = vand.u32 %v100, 4294901760
    %184 = vmatpush1.msra.mxu0 %v183
    %185 = vmatprep.subr.mxu0 0.0
    %v186 = vand.u32 %v101, 4294901760
    %187 = vmatpush1.msra.mxu0 %v186
    %188 = vmatprep.subr.mxu0 0.0
    %v189 = vand.u32 %v102, 4294901760
    %190 = vmatpush1.msra.mxu0 %v189
    %191 = vmatprep.subr.mxu0 0.0
    %v192 = vand.u32 %v103, 4294901760
    %193 = vmatpush1.msra.mxu0 %v192
    %194 = vmatprep.subr.mxu0 0.0
    %v195 = vand.u32 %v104, 4294901760
    %196 = vmatpush1.msra.mxu0 %v195
    %197 = vmatprep.subr.mxu0 0.0
    %v198 = vand.u32 %v105, 4294901760
    %199 = vmatpush1.msra.mxu0 %v198
    %200 = vmatprep.subr.mxu0 0.0
    %v201 = vand.u32 %v106, 4294901760
    %202 = vmatpush1.msra.mxu0 %v201
    %v203 = vand.u32 %v74, 4294901760
    %v204 = vsub.f32 %v74, %v203
    %v205 = vand.u32 %v204, 4294901760
    %v206 = vsub.f32 %v204, %v205
    %v207 = vand.u32 %v206, 4294901760
    %208 = vmatprep.mubr.f32.mxu0 %v207
    %v209 = vand.u32 %v73, 4294901760
    %v210 = vsub.f32 %v73, %v209
    %v211 = vand.u32 %v210, 4294901760
    %v212 = vsub.f32 %v210, %v211
    %v213 = vand.u32 %v212, 4294901760
    %214 = vmatmul.mubr.f32.gmra.mrb[0].mxu0 %v213
    %v215 = vpop.f32.mrb[0].mxu0
    %v216 = vadd.f32 0.0, %v215
    %v217 = vpop.f32.mrb[0].mxu0
    %218 = vdwg.mxu0
    %219 = vmatprep.subr.mxu0 0.0
    %v220 = vand.u32 %v75, 4294901760
    %v221 = vsub.f32 %v75, %v220
    %v222 = vand.u32 %v221, 4294901760
    %v223 = vsub.f32 %v221, %v222
    %v224 = vand.u32 %v223, 4294901760
    %225 = vmatpush1.msra.mxu0 %v224
    %226 = vmatprep.subr.mxu0 0.0
    %v227 = vand.u32 %v76, 4294901760
    %v228 = vsub.f32 %v76, %v227
    %v229 = vand.u32 %v228, 4294901760
    %v230 = vsub.f32 %v228, %v229
    %v231 = vand.u32 %v230, 4294901760
    %232 = vmatpush1.msra.mxu0 %v231
    %233 = vmatprep.subr.mxu0 0.0
    %v234 = vand.u32 %v77, 4294901760
    %v235 = vsub.f32 %v77, %v234
    %v236 = vand.u32 %v235, 4294901760
    %v237 = vsub.f32 %v235, %v236
    %v238 = vand.u32 %v237, 4294901760
    %239 = vmatpush1.msra.mxu0 %v238
    %240 = vmatprep.subr.mxu0 0.0
    %v241 = vand.u32 %v78, 4294901760
    %v242 = vsub.f32 %v78, %v241
    %v243 = vand.u32 %v242, 4294901760
    %v244 = vsub.f32 %v242, %v243
    %v245 = vand.u32 %v244, 4294901760
    %246 = vmatpush1.msra.mxu0 %v245
    %247 = vmatprep.subr.mxu0 0.0
    %v248 = vand.u32 %v79, 4294901760
    %v249 = vsub.f32 %v79, %v248
    %v250 = vand.u32 %v249, 4294901760
    %v251 = vsub.f32 %v249, %v250
    %v252 = vand.u32 %v251, 4294901760
    %253 = vmatpush1.msra.mxu0 %v252
    %254 = vmatprep.subr.mxu0 0.0
    %v255 = vand.u32 %v80, 4294901760
    %v256 = vsub.f32 %v80, %v255
    %v257 = vand.u32 %v256, 4294901760
    %v258 = vsub.f32 %v256, %v257
    %v259 = vand.u32 %v258, 4294901760
    %260 = vmatpush1.msra.mxu0 %v259
    %261 = vmatprep.subr.mxu0 0.0
    %v262 = vand.u32 %v81, 4294901760
    %v263 = vsub.f32 %v81, %v262
    %v264 = vand.u32 %v263, 4294901760
    %v265 = vsub.f32 %v263, %v264
    %v266 = vand.u32 %v265, 4294901760
    %267 = vmatpush1.msra.mxu0 %v266
    %268 = vmatprep.subr.mxu0 0.0
    %v269 = vand.u32 %v82, 4294901760
    %v270 = vsub.f32 %v82, %v269
    %v271 = vand.u32 %v270, 4294901760
    %v272 = vsub.f32 %v270, %v271
    %v273 = vand.u32 %v272, 4294901760
    %274 = vmatpush1.msra.mxu0 %v273
    %275 = vmatprep.subr.mxu0 0.0
    %v276 = vand.u32 %v83, 4294901760
    %v277 = vsub.f32 %v83, %v276
    %v278 = vand.u32 %v277, 4294901760
    %v279 = vsub.f32 %v277, %v278
    %v280 = vand.u32 %v279, 4294901760
    %281 = vmatpush1.msra.mxu0 %v280
    %282 = vmatprep.subr.mxu0 0.0
    %v283 = vand.u32 %v84, 4294901760
    %v284 = vsub.f32 %v84, %v283
    %v285 = vand.u32 %v284, 4294901760
    %v286 = vsub.f32 %v284, %v285
    %v287 = vand.u32 %v286, 4294901760
    %288 = vmatpush1.msra.mxu0 %v287
    %289 = vmatprep.subr.mxu0 0.0
    %v290 = vand.u32 %v85, 4294901760
    %v291 = vsub.f32 %v85, %v290
    %v292 = vand.u32 %v291, 4294901760
    %v293 = vsub.f32 %v291, %v292
    %v294 = vand.u32 %v293, 4294901760
    %295 = vmatpush1.msra.mxu0 %v294
    %296 = vmatprep.subr.mxu0 0.0
    %v297 = vand.u32 %v86, 4294901760
    %v298 = vsub.f32 %v86, %v297
    %v299 = vand.u32 %v298, 4294901760
    %v300 = vsub.f32 %v298, %v299
    %v301 = vand.u32 %v300, 4294901760
    %302 = vmatpush1.msra.mxu0 %v301
    %303 = vmatprep.subr.mxu0 0.0
    %v304 = vand.u32 %v87, 4294901760
    %v305 = vsub.f32 %v87, %v304
    %v306 = vand.u32 %v305, 4294901760
    %v307 = vsub.f32 %v305, %v306
    %v308 = vand.u32 %v307, 4294901760
    %309 = vmatpush1.msra.mxu0 %v308
    %310 = vmatprep.subr.mxu0 0.0
    %v311 = vand.u32 %v88, 4294901760
    %v312 = vsub.f32 %v88, %v311
    %v313 = vand.u32 %v312, 4294901760
    %v314 = vsub.f32 %v312, %v313
    %v315 = vand.u32 %v314, 4294901760
    %316 = vmatpush1.msra.mxu0 %v315
    %317 = vmatprep.subr.mxu0 0.0
    %v318 = vand.u32 %v89, 4294901760
    %v319 = vsub.f32 %v89, %v318
    %v320 = vand.u32 %v319, 4294901760
    %v321 = vsub.f32 %v319, %v320
    %v322 = vand.u32 %v321, 4294901760
    %323 = vmatpush1.msra.mxu0 %v322
    %324 = vmatprep.subr.mxu0 0.0
    %v325 = vand.u32 %v90, 4294901760
    %v326 = vsub.f32 %v90, %v325
    %v327 = vand.u32 %v326, 4294901760
    %v328 = vsub.f32 %v326, %v327
    %v329 = vand.u32 %v328, 4294901760
    %330 = vmatpush1.msra.mxu0 %v329
    %331 = vmatprep.subr.mxu0 0.0
    %v332 = vand.u32 %v91, 4294901760
    %v333 = vsub.f32 %v91, %v332
    %v334 = vand.u32 %v333, 4294901760
    %v335 = vsub.f32 %v333, %v334
    %v336 = vand.u32 %v335, 4294901760
    %337 = vmatpush1.msra.mxu0 %v336
    %338 = vmatprep.subr.mxu0 0.0
    %v339 = vand.u32 %v92, 4294901760
    %v340 = vsub.f32 %v92, %v339
    %v341 = vand.u32 %v340, 4294901760
    %v342 = vsub.f32 %v340, %v341
    %v343 = vand.u32 %v342, 4294901760
    %344 = vmatpush1.msra.mxu0 %v343
    %345 = vmatprep.subr.mxu0 0.0
    %v346 = vand.u32 %v93, 4294901760
    %v347 = vsub.f32 %v93, %v346
    %v348 = vand.u32 %v347, 4294901760
    %v349 = vsub.f32 %v347, %v348
    %v350 = vand.u32 %v349, 4294901760
    %351 = vmatpush1.msra.mxu0 %v350
    %352 = vmatprep.subr.mxu0 0.0
    %v353 = vand.u32 %v94, 4294901760
    %v354 = vsub.f32 %v94, %v353
    %v355 = vand.u32 %v354, 4294901760
    %v356 = vsub.f32 %v354, %v355
    %v357 = vand.u32 %v356, 4294901760
    %358 = vmatpush1.msra.mxu0 %v357
    %359 = vmatprep.subr.mxu0 0.0
    %v360 = vand.u32 %v95, 4294901760
    %v361 = vsub.f32 %v95, %v360
    %v362 = vand.u32 %v361, 4294901760
    %v363 = vsub.f32 %v361, %v362
    %v364 = vand.u32 %v363, 4294901760
    %365 = vmatpush1.msra.mxu0 %v364
    %366 = vmatprep.subr.mxu0 0.0
    %v367 = vand.u32 %v96, 4294901760
    %v368 = vsub.f32 %v96, %v367
    %v369 = vand.u32 %v368, 4294901760
    %v370 = vsub.f32 %v368, %v369
    %v371 = vand.u32 %v370, 4294901760
    %372 = vmatpush1.msra.mxu0 %v371
    %373 = vmatprep.subr.mxu0 0.0
    %v374 = vand.u32 %v97, 4294901760
    %v375 = vsub.f32 %v97, %v374
    %v376 = vand.u32 %v375, 4294901760
    %v377 = vsub.f32 %v375, %v376
    %v378 = vand.u32 %v377, 4294901760
    %379 = vmatpush1.msra.mxu0 %v378
    %380 = vmatprep.subr.mxu0 0.0
    %v381 = vand.u32 %v98, 4294901760
    %v382 = vsub.f32 %v98, %v381
    %v383 = vand.u32 %v382, 4294901760
    %v384 = vsub.f32 %v382, %v383
    %v385 = vand.u32 %v384, 4294901760
    %386 = vmatpush1.msra.mxu0 %v385
    %387 = vmatprep.subr.mxu0 0.0
    %v388 = vand.u32 %v99, 4294901760
    %v389 = vsub.f32 %v99, %v388
    %v390 = vand.u32 %v389, 4294901760
    %v391 = vsub.f32 %v389, %v390
    %v392 = vand.u32 %v391, 4294901760
    %393 = vmatpush1.msra.mxu0 %v392
    %394 = vmatprep.subr.mxu0 0.0
    %v395 = vand.u32 %v100, 4294901760
    %v396 = vsub.f32 %v100, %v395
    %v397 = vand.u32 %v396, 4294901760
    %v398 = vsub.f32 %v396, %v397
    %v399 = vand.u32 %v398, 4294901760
    %400 = vmatpush1.msra.mxu0 %v399
    %401 = vmatprep.subr.mxu0 0.0
    %v402 = vand.u32 %v101, 4294901760
    %v403 = vsub.f32 %v101, %v402
    %v404 = vand.u32 %v403, 4294901760
    %v405 = vsub.f32 %v403, %v404
    %v406 = vand.u32 %v405, 4294901760
    %407 = vmatpush1.msra.mxu0 %v406
    %408 = vmatprep.subr.mxu0 0.0
    %v409 = vand.u32 %v102, 4294901760
    %v410 = vsub.f32 %v102, %v409
    %v411 = vand.u32 %v410, 4294901760
    %v412 = vsub.f32 %v410, %v411
    %v413 = vand.u32 %v412, 4294901760
    %414 = vmatpush1.msra.mxu0 %v413
    %415 = vmatprep.subr.mxu0 0.0
    %v416 = vand.u32 %v103, 4294901760
    %v417 = vsub.f32 %v103, %v416
    %v418 = vand.u32 %v417, 4294901760
    %v419 = vsub.f32 %v417, %v418
    %v420 = vand.u32 %v419, 4294901760
    %421 = vmatpush1.msra.mxu0 %v420
    %422 = vmatprep.subr.mxu0 0.0
    %v423 = vand.u32 %v104, 4294901760
    %v424 = vsub.f32 %v104, %v423
    %v425 = vand.u32 %v424, 4294901760
    %v426 = vsub.f32 %v424, %v425
    %v427 = vand.u32 %v426, 4294901760
    %428 = vmatpush1.msra.mxu0 %v427
    %429 = vmatprep.subr.mxu0 0.0
    %v430 = vand.u32 %v105, 4294901760
    %v431 = vsub.f32 %v105, %v430
    %v432 = vand.u32 %v431, 4294901760
    %v433 = vsub.f32 %v431, %v432
    %v434 = vand.u32 %v433, 4294901760
    %435 = vmatpush1.msra.mxu0 %v434
    %436 = vmatprep.subr.mxu0 0.0
    %v437 = vand.u32 %v106, 4294901760
    %v438 = vsub.f32 %v106, %v437
    %v439 = vand.u32 %v438, 4294901760
    %v440 = vsub.f32 %v438, %v439
    %v441 = vand.u32 %v440, 4294901760
    %442 = vmatpush1.msra.mxu0 %v441
    %v443 = vand.u32 %v74, 4294901760
    %444 = vmatprep.mubr.f32.mxu0 %v443
    %v445 = vand.u32 %v73, 4294901760
    %446 = vmatmul.mubr.f32.gmra.mrb[0].mxu0 %v445
    %v447 = vpop.f32.mrb[0].mxu0
    %v448 = vadd.f32 %v216, %v447
    %v449 = vpop.f32.mrb[0].mxu0
    %450 = vdwg.mxu0
    %451 = vmatprep.subr.mxu0 0.0
    %v452 = vand.u32 %v75, 4294901760
    %v453 = vsub.f32 %v75, %v452
    %454 = vmatpush1.msra.mxu0 %v453
    %455 = vmatprep.subr.mxu0 0.0
    %v456 = vand.u32 %v76, 4294901760
    %v457 = vsub.f32 %v76, %v456
    %458 = vmatpush1.msra.mxu0 %v457
    %459 = vmatprep.subr.mxu0 0.0
    %v460 = vand.u32 %v77, 4294901760
    %v461 = vsub.f32 %v77, %v460
    %462 = vmatpush1.msra.mxu0 %v461
    %463 = vmatprep.subr.mxu0 0.0
    %v464 = vand.u32 %v78, 4294901760
    %v465 = vsub.f32 %v78, %v464
    %466 = vmatpush1.msra.mxu0 %v465
    %467 = vmatprep.subr.mxu0 0.0
    %v468 = vand.u32 %v79, 4294901760
    %v469 = vsub.f32 %v79, %v468
    %470 = vmatpush1.msra.mxu0 %v469
    %471 = vmatprep.subr.mxu0 0.0
    %v472 = vand.u32 %v80, 4294901760
    %v473 = vsub.f32 %v80, %v472
    %474 = vmatpush1.msra.mxu0 %v473
    %475 = vmatprep.subr.mxu0 0.0
    %v476 = vand.u32 %v81, 4294901760
    %v477 = vsub.f32 %v81, %v476
    %478 = vmatpush1.msra.mxu0 %v477
    %479 = vmatprep.subr.mxu0 0.0
    %v480 = vand.u32 %v82, 4294901760
    %v481 = vsub.f32 %v82, %v480
    %482 = vmatpush1.msra.mxu0 %v481
    %483 = vmatprep.subr.mxu0 0.0
    %v484 = vand.u32 %v83, 4294901760
    %v485 = vsub.f32 %v83, %v484
    %486 = vmatpush1.msra.mxu0 %v485
    %487 = vmatprep.subr.mxu0 0.0
    %v488 = vand.u32 %v84, 4294901760
    %v489 = vsub.f32 %v84, %v488
    %490 = vmatpush1.msra.mxu0 %v489
    %491 = vmatprep.subr.mxu0 0.0
    %v492 = vand.u32 %v85, 4294901760
    %v493 = vsub.f32 %v85, %v492
    %494 = vmatpush1.msra.mxu0 %v493
    %495 = vmatprep.subr.mxu0 0.0
    %v496 = vand.u32 %v86, 4294901760
    %v497 = vsub.f32 %v86, %v496
    %498 = vmatpush1.msra.mxu0 %v497
    %499 = vmatprep.subr.mxu0 0.0
    %v500 = vand.u32 %v87, 4294901760
    %v501 = vsub.f32 %v87, %v500
    %502 = vmatpush1.msra.mxu0 %v501
    %503 = vmatprep.subr.mxu0 0.0
    %v504 = vand.u32 %v88, 4294901760
    %v505 = vsub.f32 %v88, %v504
    %506 = vmatpush1.msra.mxu0 %v505
    %507 = vmatprep.subr.mxu0 0.0
    %v508 = vand.u32 %v89, 4294901760
    %v509 = vsub.f32 %v89, %v508
    %510 = vmatpush1.msra.mxu0 %v509
    %511 = vmatprep.subr.mxu0 0.0
    %v512 = vand.u32 %v90, 4294901760
    %v513 = vsub.f32 %v90, %v512
    %514 = vmatpush1.msra.mxu0 %v513
    %515 = vmatprep.subr.mxu0 0.0
    %v516 = vand.u32 %v91, 4294901760
    %v517 = vsub.f32 %v91, %v516
    %518 = vmatpush1.msra.mxu0 %v517
    %519 = vmatprep.subr.mxu0 0.0
    %v520 = vand.u32 %v92, 4294901760
    %v521 = vsub.f32 %v92, %v520
    %522 = vmatpush1.msra.mxu0 %v521
    %523 = vmatprep.subr.mxu0 0.0
    %v524 = vand.u32 %v93, 4294901760
    %v525 = vsub.f32 %v93, %v524
    %526 = vmatpush1.msra.mxu0 %v525
    %527 = vmatprep.subr.mxu0 0.0
    %v528 = vand.u32 %v94, 4294901760
    %v529 = vsub.f32 %v94, %v528
    %530 = vmatpush1.msra.mxu0 %v529
    %531 = vmatprep.subr.mxu0 0.0
    %v532 = vand.u32 %v95, 4294901760
    %v533 = vsub.f32 %v95, %v532
    %534 = vmatpush1.msra.mxu0 %v533
    %535 = vmatprep.subr.mxu0 0.0
    %v536 = vand.u32 %v96, 4294901760
    %v537 = vsub.f32 %v96, %v536
    %538 = vmatpush1.msra.mxu0 %v537
    %539 = vmatprep.subr.mxu0 0.0
    %v540 = vand.u32 %v97, 4294901760
    %v541 = vsub.f32 %v97, %v540
    %542 = vmatpush1.msra.mxu0 %v541
    %543 = vmatprep.subr.mxu0 0.0
    %v544 = vand.u32 %v98, 4294901760
    %v545 = vsub.f32 %v98, %v544
    %546 = vmatpush1.msra.mxu0 %v545
    %547 = vmatprep.subr.mxu0 0.0
    %v548 = vand.u32 %v99, 4294901760
    %v549 = vsub.f32 %v99, %v548
    %550 = vmatpush1.msra.mxu0 %v549
    %551 = vmatprep.subr.mxu0 0.0
    %v552 = vand.u32 %v100, 4294901760
    %v553 = vsub.f32 %v100, %v552
    %554 = vmatpush1.msra.mxu0 %v553
    %555 = vmatprep.subr.mxu0 0.0
    %v556 = vand.u32 %v101, 4294901760
    %v557 = vsub.f32 %v101, %v556
    %558 = vmatpush1.msra.mxu0 %v557
    %559 = vmatprep.subr.mxu0 0.0
    %v560 = vand.u32 %v102, 4294901760
    %v561 = vsub.f32 %v102, %v560
    %562 = vmatpush1.msra.mxu0 %v561
    %563 = vmatprep.subr.mxu0 0.0
    %v564 = vand.u32 %v103, 4294901760
    %v565 = vsub.f32 %v103, %v564
    %566 = vmatpush1.msra.mxu0 %v565
    %567 = vmatprep.subr.mxu0 0.0
    %v568 = vand.u32 %v104, 4294901760
    %v569 = vsub.f32 %v104, %v568
    %570 = vmatpush1.msra.mxu0 %v569
    %571 = vmatprep.subr.mxu0 0.0
    %v572 = vand.u32 %v105, 4294901760
    %v573 = vsub.f32 %v105, %v572
    %574 = vmatpush1.msra.mxu0 %v573
    %575 = vmatprep.subr.mxu0 0.0
    %v576 = vand.u32 %v106, 4294901760
    %v577 = vsub.f32 %v106, %v576
    %578 = vmatpush1.msra.mxu0 %v577
    %v579 = vand.u32 %v74, 4294901760
    %v580 = vsub.f32 %v74, %v579
    %581 = vmatprep.mubr.f32.mxu0 %v580
    %v582 = vand.u32 %v73, 4294901760
    %v583 = vsub.f32 %v73, %v582
    %584 = vmatmul.mubr.f32.gmra.mrb[0].mxu0 %v583
    %v585 = vpop.f32.mrb[0].mxu0
    %v586 = vadd.f32 %v448, %v585
    %v587 = vpop.f32.mrb[0].mxu0
    %588 = vdwg.mxu0
    %589 = vmatprep.subr.mxu0 0.0
    %v590 = vand.u32 %v75, 4294901760
    %591 = vmatpush1.msra.mxu0 %v590
    %592 = vmatprep.subr.mxu0 0.0
    %v593 = vand.u32 %v76, 4294901760
    %594 = vmatpush1.msra.mxu0 %v593
    %595 = vmatprep.subr.mxu0 0.0
    %v596 = vand.u32 %v77, 4294901760
    %597 = vmatpush1.msra.mxu0 %v596
    %598 = vmatprep.subr.mxu0 0.0
    %v599 = vand.u32 %v78, 4294901760
    %600 = vmatpush1.msra.mxu0 %v599
    %601 = vmatprep.subr.mxu0 0.0
    %v602 = vand.u32 %v79, 4294901760
    %603 = vmatpush1.msra.mxu0 %v602
    %604 = vmatprep.subr.mxu0 0.0
    %v605 = vand.u32 %v80, 4294901760
    %606 = vmatpush1.msra.mxu0 %v605
    %607 = vmatprep.subr.mxu0 0.0
    %v608 = vand.u32 %v81, 4294901760
    %609 = vmatpush1.msra.mxu0 %v608
    %610 = vmatprep.subr.mxu0 0.0
    %v611 = vand.u32 %v82, 4294901760
    %612 = vmatpush1.msra.mxu0 %v611
    %613 = vmatprep.subr.mxu0 0.0
    %v614 = vand.u32 %v83, 4294901760
    %615 = vmatpush1.msra.mxu0 %v614
    %616 = vmatprep.subr.mxu0 0.0
    %v617 = vand.u32 %v84, 4294901760
    %618 = vmatpush1.msra.mxu0 %v617
    %619 = vmatprep.subr.mxu0 0.0
    %v620 = vand.u32 %v85, 4294901760
    %621 = vmatpush1.msra.mxu0 %v620
    %622 = vmatprep.subr.mxu0 0.0
    %v623 = vand.u32 %v86, 4294901760
    %624 = vmatpush1.msra.mxu0 %v623
    %625 = vmatprep.subr.mxu0 0.0
    %v626 = vand.u32 %v87, 4294901760
    %627 = vmatpush1.msra.mxu0 %v626
    %628 = vmatprep.subr.mxu0 0.0
    %v629 = vand.u32 %v88, 4294901760
    %630 = vmatpush1.msra.mxu0 %v629
    %631 = vmatprep.subr.mxu0 0.0
    %v632 = vand.u32 %v89, 4294901760
    %633 = vmatpush1.msra.mxu0 %v632
    %634 = vmatprep.subr.mxu0 0.0
    %v635 = vand.u32 %v90, 4294901760
    %636 = vmatpush1.msra.mxu0 %v635
    %637 = vmatprep.subr.mxu0 0.0
    %v638 = vand.u32 %v91, 4294901760
    %639 = vmatpush1.msra.mxu0 %v638
    %640 = vmatprep.subr.mxu0 0.0
    %v641 = vand.u32 %v92, 4294901760
    %642 = vmatpush1.msra.mxu0 %v641
    %643 = vmatprep.subr.mxu0 0.0
    %v644 = vand.u32 %v93, 4294901760
    %645 = vmatpush1.msra.mxu0 %v644
    %646 = vmatprep.subr.mxu0 0.0
    %v647 = vand.u32 %v94, 4294901760
    %648 = vmatpush1.msra.mxu0 %v647
    %649 = vmatprep.subr.mxu0 0.0
    %v650 = vand.u32 %v95, 4294901760
    %651 = vmatpush1.msra.mxu0 %v650
    %652 = vmatprep.subr.mxu0 0.0
    %v653 = vand.u32 %v96, 4294901760
    %654 = vmatpush1.msra.mxu0 %v653
    %655 = vmatprep.subr.mxu0 0.0
    %v656 = vand.u32 %v97, 4294901760
    %657 = vmatpush1.msra.mxu0 %v656
    %658 = vmatprep.subr.mxu0 0.0
    %v659 = vand.u32 %v98, 4294901760
    %660 = vmatpush1.msra.mxu0 %v659
    %661 = vmatprep.subr.mxu0 0.0
    %v662 = vand.u32 %v99, 4294901760
    %663 = vmatpush1.msra.mxu0 %v662
    %664 = vmatprep.subr.mxu0 0.0
    %v665 = vand.u32 %v100, 4294901760
    %666 = vmatpush1.msra.mxu0 %v665
    %667 = vmatprep.subr.mxu0 0.0
    %v668 = vand.u32 %v101, 4294901760
    %669 = vmatpush1.msra.mxu0 %v668
    %670 = vmatprep.subr.mxu0 0.0
    %v671 = vand.u32 %v102, 4294901760
    %672 = vmatpush1.msra.mxu0 %v671
    %673 = vmatprep.subr.mxu0 0.0
    %v674 = vand.u32 %v103, 4294901760
    %675 = vmatpush1.msra.mxu0 %v674
    %676 = vmatprep.subr.mxu0 0.0
    %v677 = vand.u32 %v104, 4294901760
    %678 = vmatpush1.msra.mxu0 %v677
    %679 = vmatprep.subr.mxu0 0.0
    %v680 = vand.u32 %v105, 4294901760
    %681 = vmatpush1.msra.mxu0 %v680
    %682 = vmatprep.subr.mxu0 0.0
    %v683 = vand.u32 %v106, 4294901760
    %684 = vmatpush1.msra.mxu0 %v683
    %v685 = vand.u32 %v74, 4294901760
    %v686 = vsub.f32 %v74, %v685
    %v687 = vand.u32 %v686, 4294901760
    %688 = vmatprep.mubr.f32.mxu0 %v687
    %v689 = vand.u32 %v73, 4294901760
    %v690 = vsub.f32 %v73, %v689
    %v691 = vand.u32 %v690, 4294901760
    %692 = vmatmul.mubr.f32.gmra.mrb[0].mxu0 %v691
    %v693 = vpop.f32.mrb[0].mxu0
    %v694 = vadd.f32 %v586, %v693
    %v695 = vpop.f32.mrb[0].mxu0
    %696 = vdwg.mxu0
    %697 = vmatprep.subr.mxu0 0.0
    %v698 = vand.u32 %v75, 4294901760
    %v699 = vsub.f32 %v75, %v698
    %v700 = vand.u32 %v699, 4294901760
    %701 = vmatpush1.msra.mxu0 %v700
    %702 = vmatprep.subr.mxu0 0.0
    %v703 = vand.u32 %v76, 4294901760
    %v704 = vsub.f32 %v76, %v703
    %v705 = vand.u32 %v704, 4294901760
    %706 = vmatpush1.msra.mxu0 %v705
    %707 = vmatprep.subr.mxu0 0.0
    %v708 = vand.u32 %v77, 4294901760
    %v709 = vsub.f32 %v77, %v708
    %v710 = vand.u32 %v709, 4294901760
    %711 = vmatpush1.msra.mxu0 %v710
    %712 = vmatprep.subr.mxu0 0.0
    %v713 = vand.u32 %v78, 4294901760
    %v714 = vsub.f32 %v78, %v713
    %v715 = vand.u32 %v714, 4294901760
    %716 = vmatpush1.msra.mxu0 %v715
    %717 = vmatprep.subr.mxu0 0.0
    %v718 = vand.u32 %v79, 4294901760
    %v719 = vsub.f32 %v79, %v718
    %v720 = vand.u32 %v719, 4294901760
    %721 = vmatpush1.msra.mxu0 %v720
    %722 = vmatprep.subr.mxu0 0.0
    %v723 = vand.u32 %v80, 4294901760
    %v724 = vsub.f32 %v80, %v723
    %v725 = vand.u32 %v724, 4294901760
    %726 = vmatpush1.msra.mxu0 %v725
    %727 = vmatprep.subr.mxu0 0.0
    %v728 = vand.u32 %v81, 4294901760
    %v729 = vsub.f32 %v81, %v728
    %v730 = vand.u32 %v729, 4294901760
    %731 = vmatpush1.msra.mxu0 %v730
    %732 = vmatprep.subr.mxu0 0.0
    %v733 = vand.u32 %v82, 4294901760
    %v734 = vsub.f32 %v82, %v733
    %v735 = vand.u32 %v734, 4294901760
    %736 = vmatpush1.msra.mxu0 %v735
    %737 = vmatprep.subr.mxu0 0.0
    %v738 = vand.u32 %v83, 4294901760
    %v739 = vsub.f32 %v83, %v738
    %v740 = vand.u32 %v739, 4294901760
    %741 = vmatpush1.msra.mxu0 %v740
    %742 = vmatprep.subr.mxu0 0.0
    %v743 = vand.u32 %v84, 4294901760
    %v744 = vsub.f32 %v84, %v743
    %v745 = vand.u32 %v744, 4294901760
    %746 = vmatpush1.msra.mxu0 %v745
    %747 = vmatprep.subr.mxu0 0.0
    %v748 = vand.u32 %v85, 4294901760
    %v749 = vsub.f32 %v85, %v748
    %v750 = vand.u32 %v749, 4294901760
    %751 = vmatpush1.msra.mxu0 %v750
    %752 = vmatprep.subr.mxu0 0.0
    %v753 = vand.u32 %v86, 4294901760
    %v754 = vsub.f32 %v86, %v753
    %v755 = vand.u32 %v754, 4294901760
    %756 = vmatpush1.msra.mxu0 %v755
    %757 = vmatprep.subr.mxu0 0.0
    %v758 = vand.u32 %v87, 4294901760
    %v759 = vsub.f32 %v87, %v758
    %v760 = vand.u32 %v759, 4294901760
    %761 = vmatpush1.msra.mxu0 %v760
    %762 = vmatprep.subr.mxu0 0.0
    %v763 = vand.u32 %v88, 4294901760
    %v764 = vsub.f32 %v88, %v763
    %v765 = vand.u32 %v764, 4294901760
    %766 = vmatpush1.msra.mxu0 %v765
    %767 = vmatprep.subr.mxu0 0.0
    %v768 = vand.u32 %v89, 4294901760
    %v769 = vsub.f32 %v89, %v768
    %v770 = vand.u32 %v769, 4294901760
    %771 = vmatpush1.msra.mxu0 %v770
    %772 = vmatprep.subr.mxu0 0.0
    %v773 = vand.u32 %v90, 4294901760
    %v774 = vsub.f32 %v90, %v773
    %v775 = vand.u32 %v774, 4294901760
    %776 = vmatpush1.msra.mxu0 %v775
    %777 = vmatprep.subr.mxu0 0.0
    %v778 = vand.u32 %v91, 4294901760
    %v779 = vsub.f32 %v91, %v778
    %v780 = vand.u32 %v779, 4294901760
    %781 = vmatpush1.msra.mxu0 %v780
    %782 = vmatprep.subr.mxu0 0.0
    %v783 = vand.u32 %v92, 4294901760
    %v784 = vsub.f32 %v92, %v783
    %v785 = vand.u32 %v784, 4294901760
    %786 = vmatpush1.msra.mxu0 %v785
    %787 = vmatprep.subr.mxu0 0.0
    %v788 = vand.u32 %v93, 4294901760
    %v789 = vsub.f32 %v93, %v788
    %v790 = vand.u32 %v789, 4294901760
    %791 = vmatpush1.msra.mxu0 %v790
    %792 = vmatprep.subr.mxu0 0.0
    %v793 = vand.u32 %v94, 4294901760
    %v794 = vsub.f32 %v94, %v793
    %v795 = vand.u32 %v794, 4294901760
    %796 = vmatpush1.msra.mxu0 %v795
    %797 = vmatprep.subr.mxu0 0.0
    %v798 = vand.u32 %v95, 4294901760
    %v799 = vsub.f32 %v95, %v798
    %v800 = vand.u32 %v799, 4294901760
    %801 = vmatpush1.msra.mxu0 %v800
    %802 = vmatprep.subr.mxu0 0.0
    %v803 = vand.u32 %v96, 4294901760
    %v804 = vsub.f32 %v96, %v803
    %v805 = vand.u32 %v804, 4294901760
    %806 = vmatpush1.msra.mxu0 %v805
    %807 = vmatprep.subr.mxu0 0.0
    %v808 = vand.u32 %v97, 4294901760
    %v809 = vsub.f32 %v97, %v808
    %v810 = vand.u32 %v809, 4294901760
    %811 = vmatpush1.msra.mxu0 %v810
    %812 = vmatprep.subr.mxu0 0.0
    %v813 = vand.u32 %v98, 4294901760
    %v814 = vsub.f32 %v98, %v813
    %v815 = vand.u32 %v814, 4294901760
    %816 = vmatpush1.msra.mxu0 %v815
    %817 = vmatprep.subr.mxu0 0.0
    %v818 = vand.u32 %v99, 4294901760
    %v819 = vsub.f32 %v99, %v818
    %v820 = vand.u32 %v819, 4294901760
    %821 = vmatpush1.msra.mxu0 %v820
    %822 = vmatprep.subr.mxu0 0.0
    %v823 = vand.u32 %v100, 4294901760
    %v824 = vsub.f32 %v100, %v823
    %v825 = vand.u32 %v824, 4294901760
    %826 = vmatpush1.msra.mxu0 %v825
    %827 = vmatprep.subr.mxu0 0.0
    %v828 = vand.u32 %v101, 4294901760
    %v829 = vsub.f32 %v101, %v828
    %v830 = vand.u32 %v829, 4294901760
    %831 = vmatpush1.msra.mxu0 %v830
    %832 = vmatprep.subr.mxu0 0.0
    %v833 = vand.u32 %v102, 4294901760
    %v834 = vsub.f32 %v102, %v833
    %v835 = vand.u32 %v834, 4294901760
    %836 = vmatpush1.msra.mxu0 %v835
    %837 = vmatprep.subr.mxu0 0.0
    %v838 = vand.u32 %v103, 4294901760
    %v839 = vsub.f32 %v103, %v838
    %v840 = vand.u32 %v839, 4294901760
    %841 = vmatpush1.msra.mxu0 %v840
    %842 = vmatprep.subr.mxu0 0.0
    %v843 = vand.u32 %v104, 4294901760
    %v844 = vsub.f32 %v104, %v843
    %v845 = vand.u32 %v844, 4294901760
    %846 = vmatpush1.msra.mxu0 %v845
    %847 = vmatprep.subr.mxu0 0.0
    %v848 = vand.u32 %v105, 4294901760
    %v849 = vsub.f32 %v105, %v848
    %v850 = vand.u32 %v849, 4294901760
    %851 = vmatpush1.msra.mxu0 %v850
    %852 = vmatprep.subr.mxu0 0.0
    %v853 = vand.u32 %v106, 4294901760
    %v854 = vsub.f32 %v106, %v853
    %v855 = vand.u32 %v854, 4294901760
    %856 = vmatpush1.msra.mxu0 %v855
    %v857 = vand.u32 %v74, 4294901760
    %858 = vmatprep.mubr.f32.mxu0 %v857
    %v859 = vand.u32 %v73, 4294901760
    %860 = vmatmul.mubr.f32.gmra.mrb[0].mxu0 %v859
    %v861 = vpop.f32.mrb[0].mxu0
    %v862 = vadd.f32 %v694, %v861
    %v863 = vpop.f32.mrb[0].mxu0
    %864 = vdwg.mxu0
    %865 = vmatprep.subr.mxu0 0.0
    %v866 = vand.u32 %v75, 4294901760
    %867 = vmatpush1.msra.mxu0 %v866
    %868 = vmatprep.subr.mxu0 0.0
    %v869 = vand.u32 %v76, 4294901760
    %870 = vmatpush1.msra.mxu0 %v869
    %871 = vmatprep.subr.mxu0 0.0
    %v872 = vand.u32 %v77, 4294901760
    %873 = vmatpush1.msra.mxu0 %v872
    %874 = vmatprep.subr.mxu0 0.0
    %v875 = vand.u32 %v78, 4294901760
    %876 = vmatpush1.msra.mxu0 %v875
    %877 = vmatprep.subr.mxu0 0.0
    %v878 = vand.u32 %v79, 4294901760
    %879 = vmatpush1.msra.mxu0 %v878
    %880 = vmatprep.subr.mxu0 0.0
    %v881 = vand.u32 %v80, 4294901760
    %882 = vmatpush1.msra.mxu0 %v881
    %883 = vmatprep.subr.mxu0 0.0
    %v884 = vand.u32 %v81, 4294901760
    %885 = vmatpush1.msra.mxu0 %v884
    %886 = vmatprep.subr.mxu0 0.0
    %v887 = vand.u32 %v82, 4294901760
    %888 = vmatpush1.msra.mxu0 %v887
    %889 = vmatprep.subr.mxu0 0.0
    %v890 = vand.u32 %v83, 4294901760
    %891 = vmatpush1.msra.mxu0 %v890
    %892 = vmatprep.subr.mxu0 0.0
    %v893 = vand.u32 %v84, 4294901760
    %894 = vmatpush1.msra.mxu0 %v893
    %895 = vmatprep.subr.mxu0 0.0
    %v896 = vand.u32 %v85, 4294901760
    %897 = vmatpush1.msra.mxu0 %v896
    %898 = vmatprep.subr.mxu0 0.0
    %v899 = vand.u32 %v86, 4294901760
    %900 = vmatpush1.msra.mxu0 %v899
    %901 = vmatprep.subr.mxu0 0.0
    %v902 = vand.u32 %v87, 4294901760
    %903 = vmatpush1.msra.mxu0 %v902
    %904 = vmatprep.subr.mxu0 0.0
    %v905 = vand.u32 %v88, 4294901760
    %906 = vmatpush1.msra.mxu0 %v905
    %907 = vmatprep.subr.mxu0 0.0
    %v908 = vand.u32 %v89, 4294901760
    %909 = vmatpush1.msra.mxu0 %v908
    %910 = vmatprep.subr.mxu0 0.0
    %v911 = vand.u32 %v90, 4294901760
    %912 = vmatpush1.msra.mxu0 %v911
    %913 = vmatprep.subr.mxu0 0.0
    %v914 = vand.u32 %v91, 4294901760
    %915 = vmatpush1.msra.mxu0 %v914
    %916 = vmatprep.subr.mxu0 0.0
    %v917 = vand.u32 %v92, 4294901760
    %918 = vmatpush1.msra.mxu0 %v917
    %919 = vmatprep.subr.mxu0 0.0
    %v920 = vand.u32 %v93, 4294901760
    %921 = vmatpush1.msra.mxu0 %v920
    %922 = vmatprep.subr.mxu0 0.0
    %v923 = vand.u32 %v94, 4294901760
    %924 = vmatpush1.msra.mxu0 %v923
    %925 = vmatprep.subr.mxu0 0.0
    %v926 = vand.u32 %v95, 4294901760
    %927 = vmatpush1.msra.mxu0 %v926
    %928 = vmatprep.subr.mxu0 0.0
    %v929 = vand.u32 %v96, 4294901760
    %930 = vmatpush1.msra.mxu0 %v929
    %931 = vmatprep.subr.mxu0 0.0
    %v932 = vand.u32 %v97, 4294901760
    %933 = vmatpush1.msra.mxu0 %v932
    %934 = vmatprep.subr.mxu0 0.0
    %v935 = vand.u32 %v98, 4294901760
    %936 = vmatpush1.msra.mxu0 %v935
    %937 = vmatprep.subr.mxu0 0.0
    %v938 = vand.u32 %v99, 4294901760
    %939 = vmatpush1.msra.mxu0 %v938
    %940 = vmatprep.subr.mxu0 0.0
    %v941 = vand.u32 %v100, 4294901760
    %942 = vmatpush1.msra.mxu0 %v941
    %943 = vmatprep.subr.mxu0 0.0
    %v944 = vand.u32 %v101, 4294901760
    %945 = vmatpush1.msra.mxu0 %v944
    %946 = vmatprep.subr.mxu0 0.0
    %v947 = vand.u32 %v102, 4294901760
    %948 = vmatpush1.msra.mxu0 %v947
    %949 = vmatprep.subr.mxu0 0.0
    %v950 = vand.u32 %v103, 4294901760
    %951 = vmatpush1.msra.mxu0 %v950
    %952 = vmatprep.subr.mxu0 0.0
    %v953 = vand.u32 %v104, 4294901760
    %954 = vmatpush1.msra.mxu0 %v953
    %955 = vmatprep.subr.mxu0 0.0
    %v956 = vand.u32 %v105, 4294901760
    %957 = vmatpush1.msra.mxu0 %v956
    %958 = vmatprep.subr.mxu0 0.0
    %v959 = vand.u32 %v106, 4294901760
    %960 = vmatpush1.msra.mxu0 %v959
    %v961 = vand.u32 %v74, 4294901760
    %962 = vmatprep.mubr.f32.mxu0 %v961
    %v963 = vand.u32 %v73, 4294901760
    %964 = vmatmul.mubr.f32.gmra.mrb[0].mxu0 %v963
    %v965 = vpop.f32.mrb[0].mxu0
    %v966 = vadd.f32 %v862, %v965
    %v967 = vpop.f32.mrb[0].mxu0
    %968 = vdwg.mxu0
    %v969 = vlaneseq
    %v970 = vshrl.u32 %v969, 7
    %v971 = vadd.s32 %v970, 8
    %v972 = vadd.s32 %v970, 16
    %v973 = vadd.s32 %v970, 24
    %v974 = vadd.s32 %v970, 32
    %v975 = vadd.s32 %v970, 40
    %v976 = vadd.s32 %v970, 48
    %v977 = vadd.s32 %v970, 56
    %v978 = vadd.s32 %v970, 64
    %v979 = vadd.s32 %v970, 72
    %v980 = vadd.s32 %v970, 80
    %v981 = vadd.s32 %v970, 88
    %v982 = vadd.s32 %v970, 96
    %v983 = vadd.s32 %v970, 104
    %v984 = vadd.s32 %v970, 112
    %v985 = vadd.s32 %v970, 120
    %v986 = vshra.s32 %v970, 5
    %v987 = vshra.s32 %v971, 5
    %v988 = vshra.s32 %v972, 5
    %v989 = vshra.s32 %v973, 5
    %v990 = vshra.s32 %v974, 5
    %v991 = vshra.s32 %v975, 5
    %v992 = vshra.s32 %v976, 5
    %v993 = vshra.s32 %v977, 5
    %v994 = vshra.s32 %v978, 5
    %v995 = vshra.s32 %v979, 5
    %v996 = vshra.s32 %v980, 5
    %v997 = vshra.s32 %v981, 5
    %v998 = vshra.s32 %v982, 5
    %v999 = vshra.s32 %v983, 5
    %v1000 = vshra.s32 %v984, 5
    %v1001 = vshra.s32 %v985, 5
    %v1002 = vshra.s32 %v30, 5
    %vm1003 = vcmp.eq.s32.totalorder %v986, %v1002
    %vm1004 = vcmp.eq.s32.totalorder %v987, %v1002
    %vm1005 = vcmp.eq.s32.totalorder %v988, %v1002
    %vm1006 = vcmp.eq.s32.totalorder %v989, %v1002
    %vm1007 = vcmp.eq.s32.totalorder %v990, %v1002
    %vm1008 = vcmp.eq.s32.totalorder %v991, %v1002
    %vm1009 = vcmp.eq.s32.totalorder %v992, %v1002
    %vm1010 = vcmp.eq.s32.totalorder %v993, %v1002
    %vm1011 = vcmp.eq.s32.totalorder %v994, %v1002
    %vm1012 = vcmp.eq.s32.totalorder %v995, %v1002
    %vm1013 = vcmp.eq.s32.totalorder %v996, %v1002
    %vm1014 = vcmp.eq.s32.totalorder %v997, %v1002
    %vm1015 = vcmp.eq.s32.totalorder %v998, %v1002
    %vm1016 = vcmp.eq.s32.totalorder %v999, %v1002
    %vm1017 = vcmp.eq.s32.totalorder %v1000, %v1002
    %vm1018 = vcmp.eq.s32.totalorder %v1001, %v1002
    %v1019 = vsel %vm1003, 1, 0
    %v1020 = vsel %vm1004, 1, 0
    %v1021 = vsel %vm1005, 1, 0
    %v1022 = vsel %vm1006, 1, 0
    %v1023 = vsel %vm1007, 1, 0
    %v1024 = vsel %vm1008, 1, 0
    %v1025 = vsel %vm1009, 1, 0
    %v1026 = vsel %vm1010, 1, 0
    %v1027 = vsel %vm1011, 1, 0
    %v1028 = vsel %vm1012, 1, 0
    %v1029 = vsel %vm1013, 1, 0
    %v1030 = vsel %vm1014, 1, 0
    %v1031 = vsel %vm1015, 1, 0
    %v1032 = vsel %vm1016, 1, 0
    %v1033 = vsel %vm1017, 1, 0
    %v1034 = vsel %vm1018, 1, 0
    %v1035 = vcvt.s32.f32 %v1019
    %v1036 = vcvt.s32.f32 %v1020
    %v1037 = vcvt.s32.f32 %v1021
    %v1038 = vcvt.s32.f32 %v1022
    %v1039 = vcvt.s32.f32 %v1023
    %v1040 = vcvt.s32.f32 %v1024
    %v1041 = vcvt.s32.f32 %v1025
    %v1042 = vcvt.s32.f32 %v1026
    %v1043 = vcvt.s32.f32 %v1027
    %v1044 = vcvt.s32.f32 %v1028
    %v1045 = vcvt.s32.f32 %v1029
    %v1046 = vcvt.s32.f32 %v1030
    %v1047 = vcvt.s32.f32 %v1031
    %v1048 = vcvt.s32.f32 %v1032
    %v1049 = vcvt.s32.f32 %v1033
    %v1050 = vcvt.s32.f32 %v1034
    %1051 = vmatprep.subr.mxu0 0.0
    %v1052 = vand.u32 %v1035, 4294901760
    %1053 = vmatpush1.msra.mxu0 %v1052
    %1054 = vmatprep.subr.mxu0 0.0
    %v1055 = vand.u32 %v1036, 4294901760
    %1056 = vmatpush1.msra.mxu0 %v1055
    %1057 = vmatprep.subr.mxu0 0.0
    %v1058 = vand.u32 %v1037, 4294901760
    %1059 = vmatpush1.msra.mxu0 %v1058
    %1060 = vmatprep.subr.mxu0 0.0
    %v1061 = vand.u32 %v1038, 4294901760
    %1062 = vmatpush1.msra.mxu0 %v1061
    %1063 = vmatprep.subr.mxu0 0.0
    %v1064 = vand.u32 %v1039, 4294901760
    %1065 = vmatpush1.msra.mxu0 %v1064
    %1066 = vmatprep.subr.mxu0 0.0
    %v1067 = vand.u32 %v1040, 4294901760
    %1068 = vmatpush1.msra.mxu0 %v1067
    %1069 = vmatprep.subr.mxu0 0.0
    %v1070 = vand.u32 %v1041, 4294901760
    %1071 = vmatpush1.msra.mxu0 %v1070
    %1072 = vmatprep.subr.mxu0 0.0
    %v1073 = vand.u32 %v1042, 4294901760
    %1074 = vmatpush1.msra.mxu0 %v1073
    %1075 = vmatprep.subr.mxu0 0.0
    %v1076 = vand.u32 %v1043, 4294901760
    %1077 = vmatpush1.msra.mxu0 %v1076
    %1078 = vmatprep.subr.mxu0 0.0
    %v1079 = vand.u32 %v1044, 4294901760
    %1080 = vmatpush1.msra.mxu0 %v1079
    %1081 = vmatprep.subr.mxu0 0.0
    %v1082 = vand.u32 %v1045, 4294901760
    %1083 = vmatpush1.msra.mxu0 %v1082
    %1084 = vmatprep.subr.mxu0 0.0
    %v1085 = vand.u32 %v1046, 4294901760
    %1086 = vmatpush1.msra.mxu0 %v1085
    %1087 = vmatprep.subr.mxu0 0.0
    %v1088 = vand.u32 %v1047, 4294901760
    %1089 = vmatpush1.msra.mxu0 %v1088
    %1090 = vmatprep.subr.mxu0 0.0
    %v1091 = vand.u32 %v1048, 4294901760
    %1092 = vmatpush1.msra.mxu0 %v1091
    %1093 = vmatprep.subr.mxu0 0.0
    %v1094 = vand.u32 %v1049, 4294901760
    %1095 = vmatpush1.msra.mxu0 %v1094
    %1096 = vmatprep.subr.mxu0 0.0
    %v1097 = vand.u32 %v1050, 4294901760
    %1098 = vmatpush1.msra.mxu0 %v1097
    %1099 = vmatprep.subr.mxu0 0.0
    %1100 = vmatpush1.msra.mxu0 0.0
    %1101 = vmatprep.subr.mxu0 0.0
    %1102 = vmatpush1.msra.mxu0 0.0
    %1103 = vmatprep.subr.mxu0 0.0
    %1104 = vmatpush1.msra.mxu0 0.0
    %1105 = vmatprep.subr.mxu0 0.0
    %1106 = vmatpush1.msra.mxu0 0.0
    %1107 = vmatprep.subr.mxu0 0.0
    %1108 = vmatpush1.msra.mxu0 0.0
    %1109 = vmatprep.subr.mxu0 0.0
    %1110 = vmatpush1.msra.mxu0 0.0
    %1111 = vmatprep.subr.mxu0 0.0
    %1112 = vmatpush1.msra.mxu0 0.0
    %1113 = vmatprep.subr.mxu0 0.0
    %1114 = vmatpush1.msra.mxu0 0.0
    %1115 = vmatprep.subr.mxu0 0.0
    %1116 = vmatpush1.msra.mxu0 0.0
    %1117 = vmatprep.subr.mxu0 0.0
    %1118 = vmatpush1.msra.mxu0 0.0
    %1119 = vmatprep.subr.mxu0 0.0
    %1120 = vmatpush1.msra.mxu0 0.0
    %1121 = vmatprep.subr.mxu0 0.0
    %1122 = vmatpush1.msra.mxu0 0.0
    %1123 = vmatprep.subr.mxu0 0.0
    %1124 = vmatpush1.msra.mxu0 0.0
    %1125 = vmatprep.subr.mxu0 0.0
    %1126 = vmatpush1.msra.mxu0 0.0
    %1127 = vmatprep.subr.mxu0 0.0
    %1128 = vmatpush1.msra.mxu0 0.0
    %1129 = vmatprep.subr.mxu0 0.0
    %1130 = vmatpush1.msra.mxu0 0.0
    %1131 = vmatprep.mubr.f32.mxu0 0.0
    %v1132 = vand.u32 %v966, 4294901760
    %v1133 = vsub.f32 %v966, %v1132
    %v1134 = vand.u32 %v1133, 4294901760
    %v1135 = vsub.f32 %v1133, %v1134
    %v1136 = vand.u32 %v1135, 4294901760
    %1137 = vmatmul.mubr.f32.gmra.mrb[0].mxu0 %v1136
    %v1138 = vpop.f32.mrb[0].mxu0
    %v1139 = vadd.f32 0.0, %v1138
    %v1140 = vpop.f32.mrb[0].mxu0
    %1141 = vdwg.mxu0
    %1142 = vmatprep.subr.mxu0 0.0
    %v1143 = vand.u32 %v1035, 4294901760
    %v1144 = vsub.f32 %v1035, %v1143
    %v1145 = vand.u32 %v1144, 4294901760
    %v1146 = vsub.f32 %v1144, %v1145
    %v1147 = vand.u32 %v1146, 4294901760
    %1148 = vmatpush1.msra.mxu0 %v1147
    %1149 = vmatprep.subr.mxu0 0.0
    %v1150 = vand.u32 %v1036, 4294901760
    %v1151 = vsub.f32 %v1036, %v1150
    %v1152 = vand.u32 %v1151, 4294901760
    %v1153 = vsub.f32 %v1151, %v1152
    %v1154 = vand.u32 %v1153, 4294901760
    %1155 = vmatpush1.msra.mxu0 %v1154
    %1156 = vmatprep.subr.mxu0 0.0
    %v1157 = vand.u32 %v1037, 4294901760
    %v1158 = vsub.f32 %v1037, %v1157
    %v1159 = vand.u32 %v1158, 4294901760
    %v1160 = vsub.f32 %v1158, %v1159
    %v1161 = vand.u32 %v1160, 4294901760
    %1162 = vmatpush1.msra.mxu0 %v1161
    %1163 = vmatprep.subr.mxu0 0.0
    %v1164 = vand.u32 %v1038, 4294901760
    %v1165 = vsub.f32 %v1038, %v1164
    %v1166 = vand.u32 %v1165, 4294901760
    %v1167 = vsub.f32 %v1165, %v1166
    %v1168 = vand.u32 %v1167, 4294901760
    %1169 = vmatpush1.msra.mxu0 %v1168
    %1170 = vmatprep.subr.mxu0 0.0
    %v1171 = vand.u32 %v1039, 4294901760
    %v1172 = vsub.f32 %v1039, %v1171
    %v1173 = vand.u32 %v1172, 4294901760
    %v1174 = vsub.f32 %v1172, %v1173
    %v1175 = vand.u32 %v1174, 4294901760
    %1176 = vmatpush1.msra.mxu0 %v1175
    %1177 = vmatprep.subr.mxu0 0.0
    %v1178 = vand.u32 %v1040, 4294901760
    %v1179 = vsub.f32 %v1040, %v1178
    %v1180 = vand.u32 %v1179, 4294901760
    %v1181 = vsub.f32 %v1179, %v1180
    %v1182 = vand.u32 %v1181, 4294901760
    %1183 = vmatpush1.msra.mxu0 %v1182
    %1184 = vmatprep.subr.mxu0 0.0
    %v1185 = vand.u32 %v1041, 4294901760
    %v1186 = vsub.f32 %v1041, %v1185
    %v1187 = vand.u32 %v1186, 4294901760
    %v1188 = vsub.f32 %v1186, %v1187
    %v1189 = vand.u32 %v1188, 4294901760
    %1190 = vmatpush1.msra.mxu0 %v1189
    %1191 = vmatprep.subr.mxu0 0.0
    %v1192 = vand.u32 %v1042, 4294901760
    %v1193 = vsub.f32 %v1042, %v1192
    %v1194 = vand.u32 %v1193, 4294901760
    %v1195 = vsub.f32 %v1193, %v1194
    %v1196 = vand.u32 %v1195, 4294901760
    %1197 = vmatpush1.msra.mxu0 %v1196
    %1198 = vmatprep.subr.mxu0 0.0
    %v1199 = vand.u32 %v1043, 4294901760
    %v1200 = vsub.f32 %v1043, %v1199
    %v1201 = vand.u32 %v1200, 4294901760
    %v1202 = vsub.f32 %v1200, %v1201
    %v1203 = vand.u32 %v1202, 4294901760
    %1204 = vmatpush1.msra.mxu0 %v1203
    %1205 = vmatprep.subr.mxu0 0.0
    %v1206 = vand.u32 %v1044, 4294901760
    %v1207 = vsub.f32 %v1044, %v1206
    %v1208 = vand.u32 %v1207, 4294901760
    %v1209 = vsub.f32 %v1207, %v1208
    %v1210 = vand.u32 %v1209, 4294901760
    %1211 = vmatpush1.msra.mxu0 %v1210
    %1212 = vmatprep.subr.mxu0 0.0
    %v1213 = vand.u32 %v1045, 4294901760
    %v1214 = vsub.f32 %v1045, %v1213
    %v1215 = vand.u32 %v1214, 4294901760
    %v1216 = vsub.f32 %v1214, %v1215
    %v1217 = vand.u32 %v1216, 4294901760
    %1218 = vmatpush1.msra.mxu0 %v1217
    %1219 = vmatprep.subr.mxu0 0.0
    %v1220 = vand.u32 %v1046, 4294901760
    %v1221 = vsub.f32 %v1046, %v1220
    %v1222 = vand.u32 %v1221, 4294901760
    %v1223 = vsub.f32 %v1221, %v1222
    %v1224 = vand.u32 %v1223, 4294901760
    %1225 = vmatpush1.msra.mxu0 %v1224
    %1226 = vmatprep.subr.mxu0 0.0
    %v1227 = vand.u32 %v1047, 4294901760
    %v1228 = vsub.f32 %v1047, %v1227
    %v1229 = vand.u32 %v1228, 4294901760
    %v1230 = vsub.f32 %v1228, %v1229
    %v1231 = vand.u32 %v1230, 4294901760
    %1232 = vmatpush1.msra.mxu0 %v1231
    %1233 = vmatprep.subr.mxu0 0.0
    %v1234 = vand.u32 %v1048, 4294901760
    %v1235 = vsub.f32 %v1048, %v1234
    %v1236 = vand.u32 %v1235, 4294901760
    %v1237 = vsub.f32 %v1235, %v1236
    %v1238 = vand.u32 %v1237, 4294901760
    %1239 = vmatpush1.msra.mxu0 %v1238
    %1240 = vmatprep.subr.mxu0 0.0
    %v1241 = vand.u32 %v1049, 4294901760
    %v1242 = vsub.f32 %v1049, %v1241
    %v1243 = vand.u32 %v1242, 4294901760
    %v1244 = vsub.f32 %v1242, %v1243
    %v1245 = vand.u32 %v1244, 4294901760
    %1246 = vmatpush1.msra.mxu0 %v1245
    %1247 = vmatprep.subr.mxu0 0.0
    %v1248 = vand.u32 %v1050, 4294901760
    %v1249 = vsub.f32 %v1050, %v1248
    %v1250 = vand.u32 %v1249, 4294901760
    %v1251 = vsub.f32 %v1249, %v1250
    %v1252 = vand.u32 %v1251, 4294901760
    %1253 = vmatpush1.msra.mxu0 %v1252
    %1254 = vmatprep.subr.mxu0 0.0
    %1255 = vmatpush1.msra.mxu0 0.0
    %1256 = vmatprep.subr.mxu0 0.0
    %1257 = vmatpush1.msra.mxu0 0.0
    %1258 = vmatprep.subr.mxu0 0.0
    %1259 = vmatpush1.msra.mxu0 0.0
    %1260 = vmatprep.subr.mxu0 0.0
    %1261 = vmatpush1.msra.mxu0 0.0
    %1262 = vmatprep.subr.mxu0 0.0
    %1263 = vmatpush1.msra.mxu0 0.0
    %1264 = vmatprep.subr.mxu0 0.0
    %1265 = vmatpush1.msra.mxu0 0.0
    %1266 = vmatprep.subr.mxu0 0.0
    %1267 = vmatpush1.msra.mxu0 0.0
    %1268 = vmatprep.subr.mxu0 0.0
    %1269 = vmatpush1.msra.mxu0 0.0
    %1270 = vmatprep.subr.mxu0 0.0
    %1271 = vmatpush1.msra.mxu0 0.0
    %1272 = vmatprep.subr.mxu0 0.0
    %1273 = vmatpush1.msra.mxu0 0.0
    %1274 = vmatprep.subr.mxu0 0.0
    %1275 = vmatpush1.msra.mxu0 0.0
    %1276 = vmatprep.subr.mxu0 0.0
    %1277 = vmatpush1.msra.mxu0 0.0
    %1278 = vmatprep.subr.mxu0 0.0
    %1279 = vmatpush1.msra.mxu0 0.0
    %1280 = vmatprep.subr.mxu0 0.0
    %1281 = vmatpush1.msra.mxu0 0.0
    %1282 = vmatprep.subr.mxu0 0.0
    %1283 = vmatpush1.msra.mxu0 0.0
    %1284 = vmatprep.subr.mxu0 0.0
    %1285 = vmatpush1.msra.mxu0 0.0
    %1286 = vmatprep.mubr.f32.mxu0 0.0
    %v1287 = vand.u32 %v966, 4294901760
    %1288 = vmatmul.mubr.f32.gmra.mrb[0].mxu0 %v1287
    %v1289 = vpop.f32.mrb[0].mxu0
    %v1290 = vadd.f32 %v1139, %v1289
    %v1291 = vpop.f32.mrb[0].mxu0
    %1292 = vdwg.mxu0
    %1293 = vmatprep.subr.mxu0 0.0
    %v1294 = vand.u32 %v1035, 4294901760
    %v1295 = vsub.f32 %v1035, %v1294
    %1296 = vmatpush1.msra.mxu0 %v1295
    %1297 = vmatprep.subr.mxu0 0.0
    %v1298 = vand.u32 %v1036, 4294901760
    %v1299 = vsub.f32 %v1036, %v1298
    %1300 = vmatpush1.msra.mxu0 %v1299
    %1301 = vmatprep.subr.mxu0 0.0
    %v1302 = vand.u32 %v1037, 4294901760
    %v1303 = vsub.f32 %v1037, %v1302
    %1304 = vmatpush1.msra.mxu0 %v1303
    %1305 = vmatprep.subr.mxu0 0.0
    %v1306 = vand.u32 %v1038, 4294901760
    %v1307 = vsub.f32 %v1038, %v1306
    %1308 = vmatpush1.msra.mxu0 %v1307
    %1309 = vmatprep.subr.mxu0 0.0
    %v1310 = vand.u32 %v1039, 4294901760
    %v1311 = vsub.f32 %v1039, %v1310
    %1312 = vmatpush1.msra.mxu0 %v1311
    %1313 = vmatprep.subr.mxu0 0.0
    %v1314 = vand.u32 %v1040, 4294901760
    %v1315 = vsub.f32 %v1040, %v1314
    %1316 = vmatpush1.msra.mxu0 %v1315
    %1317 = vmatprep.subr.mxu0 0.0
    %v1318 = vand.u32 %v1041, 4294901760
    %v1319 = vsub.f32 %v1041, %v1318
    %1320 = vmatpush1.msra.mxu0 %v1319
    %1321 = vmatprep.subr.mxu0 0.0
    %v1322 = vand.u32 %v1042, 4294901760
    %v1323 = vsub.f32 %v1042, %v1322
    %1324 = vmatpush1.msra.mxu0 %v1323
    %1325 = vmatprep.subr.mxu0 0.0
    %v1326 = vand.u32 %v1043, 4294901760
    %v1327 = vsub.f32 %v1043, %v1326
    %1328 = vmatpush1.msra.mxu0 %v1327
    %1329 = vmatprep.subr.mxu0 0.0
    %v1330 = vand.u32 %v1044, 4294901760
    %v1331 = vsub.f32 %v1044, %v1330
    %1332 = vmatpush1.msra.mxu0 %v1331
    %1333 = vmatprep.subr.mxu0 0.0
    %v1334 = vand.u32 %v1045, 4294901760
    %v1335 = vsub.f32 %v1045, %v1334
    %1336 = vmatpush1.msra.mxu0 %v1335
    %1337 = vmatprep.subr.mxu0 0.0
    %v1338 = vand.u32 %v1046, 4294901760
    %v1339 = vsub.f32 %v1046, %v1338
    %1340 = vmatpush1.msra.mxu0 %v1339
    %1341 = vmatprep.subr.mxu0 0.0
    %v1342 = vand.u32 %v1047, 4294901760
    %v1343 = vsub.f32 %v1047, %v1342
    %1344 = vmatpush1.msra.mxu0 %v1343
    %1345 = vmatprep.subr.mxu0 0.0
    %v1346 = vand.u32 %v1048, 4294901760
    %v1347 = vsub.f32 %v1048, %v1346
    %1348 = vmatpush1.msra.mxu0 %v1347
    %1349 = vmatprep.subr.mxu0 0.0
    %v1350 = vand.u32 %v1049, 4294901760
    %v1351 = vsub.f32 %v1049, %v1350
    %1352 = vmatpush1.msra.mxu0 %v1351
    %1353 = vmatprep.subr.mxu0 0.0
    %v1354 = vand.u32 %v1050, 4294901760
    %v1355 = vsub.f32 %v1050, %v1354
    %1356 = vmatpush1.msra.mxu0 %v1355
    %1357 = vmatprep.subr.mxu0 0.0
    %1358 = vmatpush1.msra.mxu0 0.0
    %1359 = vmatprep.subr.mxu0 0.0
    %1360 = vmatpush1.msra.mxu0 0.0
    %1361 = vmatprep.subr.mxu0 0.0
    %1362 = vmatpush1.msra.mxu0 0.0
    %1363 = vmatprep.subr.mxu0 0.0
    %1364 = vmatpush1.msra.mxu0 0.0
    %1365 = vmatprep.subr.mxu0 0.0
    %1366 = vmatpush1.msra.mxu0 0.0
    %1367 = vmatprep.subr.mxu0 0.0
    %1368 = vmatpush1.msra.mxu0 0.0
    %1369 = vmatprep.subr.mxu0 0.0
    %1370 = vmatpush1.msra.mxu0 0.0
    %1371 = vmatprep.subr.mxu0 0.0
    %1372 = vmatpush1.msra.mxu0 0.0
    %1373 = vmatprep.subr.mxu0 0.0
    %1374 = vmatpush1.msra.mxu0 0.0
    %1375 = vmatprep.subr.mxu0 0.0
    %1376 = vmatpush1.msra.mxu0 0.0
    %1377 = vmatprep.subr.mxu0 0.0
    %1378 = vmatpush1.msra.mxu0 0.0
    %1379 = vmatprep.subr.mxu0 0.0
    %1380 = vmatpush1.msra.mxu0 0.0
    %1381 = vmatprep.subr.mxu0 0.0
    %1382 = vmatpush1.msra.mxu0 0.0
    %1383 = vmatprep.subr.mxu0 0.0
    %1384 = vmatpush1.msra.mxu0 0.0
    %1385 = vmatprep.subr.mxu0 0.0
    %1386 = vmatpush1.msra.mxu0 0.0
    %1387 = vmatprep.subr.mxu0 0.0
    %1388 = vmatpush1.msra.mxu0 0.0
    %1389 = vmatprep.mubr.f32.mxu0 0.0
    %v1390 = vand.u32 %v966, 4294901760
    %v1391 = vsub.f32 %v966, %v1390
    %1392 = vmatmul.mubr.f32.gmra.mrb[0].mxu0 %v1391
    %v1393 = vpop.f32.mrb[0].mxu0
    %v1394 = vadd.f32 %v1290, %v1393
    %v1395 = vpop.f32.mrb[0].mxu0
    %1396 = vdwg.mxu0
    %1397 = vmatprep.subr.mxu0 0.0
    %v1398 = vand.u32 %v1035, 4294901760
    %1399 = vmatpush1.msra.mxu0 %v1398
    %1400 = vmatprep.subr.mxu0 0.0
    %v1401 = vand.u32 %v1036, 4294901760
    %1402 = vmatpush1.msra.mxu0 %v1401
    %1403 = vmatprep.subr.mxu0 0.0
    %v1404 = vand.u32 %v1037, 4294901760
    %1405 = vmatpush1.msra.mxu0 %v1404
    %1406 = vmatprep.subr.mxu0 0.0
    %v1407 = vand.u32 %v1038, 4294901760
    %1408 = vmatpush1.msra.mxu0 %v1407
    %1409 = vmatprep.subr.mxu0 0.0
    %v1410 = vand.u32 %v1039, 4294901760
    %1411 = vmatpush1.msra.mxu0 %v1410
    %1412 = vmatprep.subr.mxu0 0.0
    %v1413 = vand.u32 %v1040, 4294901760
    %1414 = vmatpush1.msra.mxu0 %v1413
    %1415 = vmatprep.subr.mxu0 0.0
    %v1416 = vand.u32 %v1041, 4294901760
    %1417 = vmatpush1.msra.mxu0 %v1416
    %1418 = vmatprep.subr.mxu0 0.0
    %v1419 = vand.u32 %v1042, 4294901760
    %1420 = vmatpush1.msra.mxu0 %v1419
    %1421 = vmatprep.subr.mxu0 0.0
    %v1422 = vand.u32 %v1043, 4294901760
    %1423 = vmatpush1.msra.mxu0 %v1422
    %1424 = vmatprep.subr.mxu0 0.0
    %v1425 = vand.u32 %v1044, 4294901760
    %1426 = vmatpush1.msra.mxu0 %v1425
    %1427 = vmatprep.subr.mxu0 0.0
    %v1428 = vand.u32 %v1045, 4294901760
    %1429 = vmatpush1.msra.mxu0 %v1428
    %1430 = vmatprep.subr.mxu0 0.0
    %v1431 = vand.u32 %v1046, 4294901760
    %1432 = vmatpush1.msra.mxu0 %v1431
    %1433 = vmatprep.subr.mxu0 0.0
    %v1434 = vand.u32 %v1047, 4294901760
    %1435 = vmatpush1.msra.mxu0 %v1434
    %1436 = vmatprep.subr.mxu0 0.0
    %v1437 = vand.u32 %v1048, 4294901760
    %1438 = vmatpush1.msra.mxu0 %v1437
    %1439 = vmatprep.subr.mxu0 0.0
    %v1440 = vand.u32 %v1049, 4294901760
    %1441 = vmatpush1.msra.mxu0 %v1440
    %1442 = vmatprep.subr.mxu0 0.0
    %v1443 = vand.u32 %v1050, 4294901760
    %1444 = vmatpush1.msra.mxu0 %v1443
    %1445 = vmatprep.subr.mxu0 0.0
    %1446 = vmatpush1.msra.mxu0 0.0
    %1447 = vmatprep.subr.mxu0 0.0
    %1448 = vmatpush1.msra.mxu0 0.0
    %1449 = vmatprep.subr.mxu0 0.0
    %1450 = vmatpush1.msra.mxu0 0.0
    %1451 = vmatprep.subr.mxu0 0.0
    %1452 = vmatpush1.msra.mxu0 0.0
    %1453 = vmatprep.subr.mxu0 0.0
    %1454 = vmatpush1.msra.mxu0 0.0
    %1455 = vmatprep.subr.mxu0 0.0
    %1456 = vmatpush1.msra.mxu0 0.0
    %1457 = vmatprep.subr.mxu0 0.0
    %1458 = vmatpush1.msra.mxu0 0.0
    %1459 = vmatprep.subr.mxu0 0.0
    %1460 = vmatpush1.msra.mxu0 0.0
    %1461 = vmatprep.subr.mxu0 0.0
    %1462 = vmatpush1.msra.mxu0 0.0
    %1463 = vmatprep.subr.mxu0 0.0
    %1464 = vmatpush1.msra.mxu0 0.0
    %1465 = vmatprep.subr.mxu0 0.0
    %1466 = vmatpush1.msra.mxu0 0.0
    %1467 = vmatprep.subr.mxu0 0.0
    %1468 = vmatpush1.msra.mxu0 0.0
    %1469 = vmatprep.subr.mxu0 0.0
    %1470 = vmatpush1.msra.mxu0 0.0
    %1471 = vmatprep.subr.mxu0 0.0
    %1472 = vmatpush1.msra.mxu0 0.0
    %1473 = vmatprep.subr.mxu0 0.0
    %1474 = vmatpush1.msra.mxu0 0.0
    %1475 = vmatprep.subr.mxu0 0.0
    %1476 = vmatpush1.msra.mxu0 0.0
    %1477 = vmatprep.mubr.f32.mxu0 0.0
    %v1478 = vand.u32 %v966, 4294901760
    %v1479 = vsub.f32 %v966, %v1478
    %v1480 = vand.u32 %v1479, 4294901760
    %1481 = vmatmul.mubr.f32.gmra.mrb[0].mxu0 %v1480
    %v1482 = vpop.f32.mrb[0].mxu0
    %v1483 = vadd.f32 %v1394, %v1482
    %v1484 = vpop.f32.mrb[0].mxu0
    %1485 = vdwg.mxu0
    %1486 = vmatprep.subr.mxu0 0.0
    %v1487 = vand.u32 %v1035, 4294901760
    %v1488 = vsub.f32 %v1035, %v1487
    %v1489 = vand.u32 %v1488, 4294901760
    %1490 = vmatpush1.msra.mxu0 %v1489
    %1491 = vmatprep.subr.mxu0 0.0
    %v1492 = vand.u32 %v1036, 4294901760
    %v1493 = vsub.f32 %v1036, %v1492
    %v1494 = vand.u32 %v1493, 4294901760
    %1495 = vmatpush1.msra.mxu0 %v1494
    %1496 = vmatprep.subr.mxu0 0.0
    %v1497 = vand.u32 %v1037, 4294901760
    %v1498 = vsub.f32 %v1037, %v1497
    %v1499 = vand.u32 %v1498, 4294901760
    %1500 = vmatpush1.msra.mxu0 %v1499
    %1501 = vmatprep.subr.mxu0 0.0
    %v1502 = vand.u32 %v1038, 4294901760
    %v1503 = vsub.f32 %v1038, %v1502
    %v1504 = vand.u32 %v1503, 4294901760
    %1505 = vmatpush1.msra.mxu0 %v1504
    %1506 = vmatprep.subr.mxu0 0.0
    %v1507 = vand.u32 %v1039, 4294901760
    %v1508 = vsub.f32 %v1039, %v1507
    %v1509 = vand.u32 %v1508, 4294901760
    %1510 = vmatpush1.msra.mxu0 %v1509
    %1511 = vmatprep.subr.mxu0 0.0
    %v1512 = vand.u32 %v1040, 4294901760
    %v1513 = vsub.f32 %v1040, %v1512
    %v1514 = vand.u32 %v1513, 4294901760
    %1515 = vmatpush1.msra.mxu0 %v1514
    %1516 = vmatprep.subr.mxu0 0.0
    %v1517 = vand.u32 %v1041, 4294901760
    %v1518 = vsub.f32 %v1041, %v1517
    %v1519 = vand.u32 %v1518, 4294901760
    %1520 = vmatpush1.msra.mxu0 %v1519
    %1521 = vmatprep.subr.mxu0 0.0
    %v1522 = vand.u32 %v1042, 4294901760
    %v1523 = vsub.f32 %v1042, %v1522
    %v1524 = vand.u32 %v1523, 4294901760
    %1525 = vmatpush1.msra.mxu0 %v1524
    %1526 = vmatprep.subr.mxu0 0.0
    %v1527 = vand.u32 %v1043, 4294901760
    %v1528 = vsub.f32 %v1043, %v1527
    %v1529 = vand.u32 %v1528, 4294901760
    %1530 = vmatpush1.msra.mxu0 %v1529
    %1531 = vmatprep.subr.mxu0 0.0
    %v1532 = vand.u32 %v1044, 4294901760
    %v1533 = vsub.f32 %v1044, %v1532
    %v1534 = vand.u32 %v1533, 4294901760
    %1535 = vmatpush1.msra.mxu0 %v1534
    %1536 = vmatprep.subr.mxu0 0.0
    %v1537 = vand.u32 %v1045, 4294901760
    %v1538 = vsub.f32 %v1045, %v1537
    %v1539 = vand.u32 %v1538, 4294901760
    %1540 = vmatpush1.msra.mxu0 %v1539
    %1541 = vmatprep.subr.mxu0 0.0
    %v1542 = vand.u32 %v1046, 4294901760
    %v1543 = vsub.f32 %v1046, %v1542
    %v1544 = vand.u32 %v1543, 4294901760
    %1545 = vmatpush1.msra.mxu0 %v1544
    %1546 = vmatprep.subr.mxu0 0.0
    %v1547 = vand.u32 %v1047, 4294901760
    %v1548 = vsub.f32 %v1047, %v1547
    %v1549 = vand.u32 %v1548, 4294901760
    %1550 = vmatpush1.msra.mxu0 %v1549
    %1551 = vmatprep.subr.mxu0 0.0
    %v1552 = vand.u32 %v1048, 4294901760
    %v1553 = vsub.f32 %v1048, %v1552
    %v1554 = vand.u32 %v1553, 4294901760
    %1555 = vmatpush1.msra.mxu0 %v1554
    %1556 = vmatprep.subr.mxu0 0.0
    %v1557 = vand.u32 %v1049, 4294901760
    %v1558 = vsub.f32 %v1049, %v1557
    %v1559 = vand.u32 %v1558, 4294901760
    %1560 = vmatpush1.msra.mxu0 %v1559
    %1561 = vmatprep.subr.mxu0 0.0
    %v1562 = vand.u32 %v1050, 4294901760
    %v1563 = vsub.f32 %v1050, %v1562
    %v1564 = vand.u32 %v1563, 4294901760
    %1565 = vmatpush1.msra.mxu0 %v1564
    %1566 = vmatprep.subr.mxu0 0.0
    %1567 = vmatpush1.msra.mxu0 0.0
    %1568 = vmatprep.subr.mxu0 0.0
    %1569 = vmatpush1.msra.mxu0 0.0
    %1570 = vmatprep.subr.mxu0 0.0
    %1571 = vmatpush1.msra.mxu0 0.0
    %1572 = vmatprep.subr.mxu0 0.0
    %1573 = vmatpush1.msra.mxu0 0.0
    %1574 = vmatprep.subr.mxu0 0.0
    %1575 = vmatpush1.msra.mxu0 0.0
    %1576 = vmatprep.subr.mxu0 0.0
    %1577 = vmatpush1.msra.mxu0 0.0
    %1578 = vmatprep.subr.mxu0 0.0
    %1579 = vmatpush1.msra.mxu0 0.0
    %1580 = vmatprep.subr.mxu0 0.0
    %1581 = vmatpush1.msra.mxu0 0.0
    %1582 = vmatprep.subr.mxu0 0.0
    %1583 = vmatpush1.msra.mxu0 0.0
    %1584 = vmatprep.subr.mxu0 0.0
    %1585 = vmatpush1.msra.mxu0 0.0
    %1586 = vmatprep.subr.mxu0 0.0
    %1587 = vmatpush1.msra.mxu0 0.0
    %1588 = vmatprep.subr.mxu0 0.0
    %1589 = vmatpush1.msra.mxu0 0.0
    %1590 = vmatprep.subr.mxu0 0.0
    %1591 = vmatpush1.msra.mxu0 0.0
    %1592 = vmatprep.subr.mxu0 0.0
    %1593 = vmatpush1.msra.mxu0 0.0
    %1594 = vmatprep.subr.mxu0 0.0
    %1595 = vmatpush1.msra.mxu0 0.0
    %1596 = vmatprep.subr.mxu0 0.0
    %1597 = vmatpush1.msra.mxu0 0.0
    %1598 = vmatprep.mubr.f32.mxu0 0.0
    %v1599 = vand.u32 %v966, 4294901760
    %1600 = vmatmul.mubr.f32.gmra.mrb[0].mxu0 %v1599
    %v1601 = vpop.f32.mrb[0].mxu0
    %v1602 = vadd.f32 %v1483, %v1601
    %v1603 = vpop.f32.mrb[0].mxu0
    %1604 = vdwg.mxu0
    %1605 = vmatprep.subr.mxu0 0.0
    %v1606 = vand.u32 %v1035, 4294901760
    %1607 = vmatpush1.msra.mxu0 %v1606
    %1608 = vmatprep.subr.mxu0 0.0
    %v1609 = vand.u32 %v1036, 4294901760
    %1610 = vmatpush1.msra.mxu0 %v1609
    %1611 = vmatprep.subr.mxu0 0.0
    %v1612 = vand.u32 %v1037, 4294901760
    %1613 = vmatpush1.msra.mxu0 %v1612
    %1614 = vmatprep.subr.mxu0 0.0
    %v1615 = vand.u32 %v1038, 4294901760
    %1616 = vmatpush1.msra.mxu0 %v1615
    %1617 = vmatprep.subr.mxu0 0.0
    %v1618 = vand.u32 %v1039, 4294901760
    %1619 = vmatpush1.msra.mxu0 %v1618
    %1620 = vmatprep.subr.mxu0 0.0
    %v1621 = vand.u32 %v1040, 4294901760
    %1622 = vmatpush1.msra.mxu0 %v1621
    %1623 = vmatprep.subr.mxu0 0.0
    %v1624 = vand.u32 %v1041, 4294901760
    %1625 = vmatpush1.msra.mxu0 %v1624
    %1626 = vmatprep.subr.mxu0 0.0
    %v1627 = vand.u32 %v1042, 4294901760
    %1628 = vmatpush1.msra.mxu0 %v1627
    %1629 = vmatprep.subr.mxu0 0.0
    %v1630 = vand.u32 %v1043, 4294901760
    %1631 = vmatpush1.msra.mxu0 %v1630
    %1632 = vmatprep.subr.mxu0 0.0
    %v1633 = vand.u32 %v1044, 4294901760
    %1634 = vmatpush1.msra.mxu0 %v1633
    %1635 = vmatprep.subr.mxu0 0.0
    %v1636 = vand.u32 %v1045, 4294901760
    %1637 = vmatpush1.msra.mxu0 %v1636
    %1638 = vmatprep.subr.mxu0 0.0
    %v1639 = vand.u32 %v1046, 4294901760
    %1640 = vmatpush1.msra.mxu0 %v1639
    %1641 = vmatprep.subr.mxu0 0.0
    %v1642 = vand.u32 %v1047, 4294901760
    %1643 = vmatpush1.msra.mxu0 %v1642
    %1644 = vmatprep.subr.mxu0 0.0
    %v1645 = vand.u32 %v1048, 4294901760
    %1646 = vmatpush1.msra.mxu0 %v1645
    %1647 = vmatprep.subr.mxu0 0.0
    %v1648 = vand.u32 %v1049, 4294901760
    %1649 = vmatpush1.msra.mxu0 %v1648
    %1650 = vmatprep.subr.mxu0 0.0
    %v1651 = vand.u32 %v1050, 4294901760
    %1652 = vmatpush1.msra.mxu0 %v1651
    %1653 = vmatprep.subr.mxu0 0.0
    %1654 = vmatpush1.msra.mxu0 0.0
    %1655 = vmatprep.subr.mxu0 0.0
    %1656 = vmatpush1.msra.mxu0 0.0
    %1657 = vmatprep.subr.mxu0 0.0
    %1658 = vmatpush1.msra.mxu0 0.0
    %1659 = vmatprep.subr.mxu0 0.0
    %1660 = vmatpush1.msra.mxu0 0.0
    %1661 = vmatprep.subr.mxu0 0.0
    %1662 = vmatpush1.msra.mxu0 0.0
    %1663 = vmatprep.subr.mxu0 0.0
    %1664 = vmatpush1.msra.mxu0 0.0
    %1665 = vmatprep.subr.mxu0 0.0
    %1666 = vmatpush1.msra.mxu0 0.0
    %1667 = vmatprep.subr.mxu0 0.0
    %1668 = vmatpush1.msra.mxu0 0.0
    %1669 = vmatprep.subr.mxu0 0.0
    %1670 = vmatpush1.msra.mxu0 0.0
    %1671 = vmatprep.subr.mxu0 0.0
    %1672 = vmatpush1.msra.mxu0 0.0
    %1673 = vmatprep.subr.mxu0 0.0
    %1674 = vmatpush1.msra.mxu0 0.0
    %1675 = vmatprep.subr.mxu0 0.0
    %1676 = vmatpush1.msra.mxu0 0.0
    %1677 = vmatprep.subr.mxu0 0.0
    %1678 = vmatpush1.msra.mxu0 0.0
    %1679 = vmatprep.subr.mxu0 0.0
    %1680 = vmatpush1.msra.mxu0 0.0
    %1681 = vmatprep.subr.mxu0 0.0
    %1682 = vmatpush1.msra.mxu0 0.0
    %1683 = vmatprep.subr.mxu0 0.0
    %1684 = vmatpush1.msra.mxu0 0.0
    %1685 = vmatprep.mubr.f32.mxu0 0.0
    %v1686 = vand.u32 %v966, 4294901760
    %1687 = vmatmul.mubr.f32.gmra.mrb[0].mxu0 %v1686
    %v1688 = vpop.f32.mrb[0].mxu0
    %v1689 = vadd.f32 %v1602, %v1688
    %v1690 = vpop.f32.mrb[0].mxu0
    %1691 = vdwg.mxu0
    %v1692 = vmul.f32 %v1689, 0.03125
    %v1693 = vsub.f32 %v966, %v1692
    %v1694 = vmul.f32 %v1693, %v1693
    %1695 = vmatprep.subr.mxu0 0.0
    %v1696 = vand.u32 %v1035, 4294901760
    %1697 = vmatpush1.msra.mxu0 %v1696
    %1698 = vmatprep.subr.mxu0 0.0
    %v1699 = vand.u32 %v1036, 4294901760
    %1700 = vmatpush1.msra.mxu0 %v1699
    %1701 = vmatprep.subr.mxu0 0.0
    %v1702 = vand.u32 %v1037, 4294901760
    %1703 = vmatpush1.msra.mxu0 %v1702
    %1704 = vmatprep.subr.mxu0 0.0
    %v1705 = vand.u32 %v1038, 4294901760
    %1706 = vmatpush1.msra.mxu0 %v1705
    %1707 = vmatprep.subr.mxu0 0.0
    %v1708 = vand.u32 %v1039, 4294901760
    %1709 = vmatpush1.msra.mxu0 %v1708
    %1710 = vmatprep.subr.mxu0 0.0
    %v1711 = vand.u32 %v1040, 4294901760
    %1712 = vmatpush1.msra.mxu0 %v1711
    %1713 = vmatprep.subr.mxu0 0.0
    %v1714 = vand.u32 %v1041, 4294901760
    %1715 = vmatpush1.msra.mxu0 %v1714
    %1716 = vmatprep.subr.mxu0 0.0
    %v1717 = vand.u32 %v1042, 4294901760
    %1718 = vmatpush1.msra.mxu0 %v1717
    %1719 = vmatprep.subr.mxu0 0.0
    %v1720 = vand.u32 %v1043, 4294901760
    %1721 = vmatpush1.msra.mxu0 %v1720
    %1722 = vmatprep.subr.mxu0 0.0
    %v1723 = vand.u32 %v1044, 4294901760
    %1724 = vmatpush1.msra.mxu0 %v1723
    %1725 = vmatprep.subr.mxu0 0.0
    %v1726 = vand.u32 %v1045, 4294901760
    %1727 = vmatpush1.msra.mxu0 %v1726
    %1728 = vmatprep.subr.mxu0 0.0
    %v1729 = vand.u32 %v1046, 4294901760
    %1730 = vmatpush1.msra.mxu0 %v1729
    %1731 = vmatprep.subr.mxu0 0.0
    %v1732 = vand.u32 %v1047, 4294901760
    %1733 = vmatpush1.msra.mxu0 %v1732
    %1734 = vmatprep.subr.mxu0 0.0
    %v1735 = vand.u32 %v1048, 4294901760
    %1736 = vmatpush1.msra.mxu0 %v1735
    %1737 = vmatprep.subr.mxu0 0.0
    %v1738 = vand.u32 %v1049, 4294901760
    %1739 = vmatpush1.msra.mxu0 %v1738
    %1740 = vmatprep.subr.mxu0 0.0
    %v1741 = vand.u32 %v1050, 4294901760
    %1742 = vmatpush1.msra.mxu0 %v1741
    %1743 = vmatprep.subr.mxu0 0.0
    %1744 = vmatpush1.msra.mxu0 0.0
    %1745 = vmatprep.subr.mxu0 0.0
    %1746 = vmatpush1.msra.mxu0 0.0
    %1747 = vmatprep.subr.mxu0 0.0
    %1748 = vmatpush1.msra.mxu0 0.0
    %1749 = vmatprep.subr.mxu0 0.0
    %1750 = vmatpush1.msra.mxu0 0.0
    %1751 = vmatprep.subr.mxu0 0.0
    %1752 = vmatpush1.msra.mxu0 0.0
    %1753 = vmatprep.subr.mxu0 0.0
    %1754 = vmatpush1.msra.mxu0 0.0
    %1755 = vmatprep.subr.mxu0 0.0
    %1756 = vmatpush1.msra.mxu0 0.0
    %1757 = vmatprep.subr.mxu0 0.0
    %1758 = vmatpush1.msra.mxu0 0.0
    %1759 = vmatprep.subr.mxu0 0.0
    %1760 = vmatpush1.msra.mxu0 0.0
    %1761 = vmatprep.subr.mxu0 0.0
    %1762 = vmatpush1.msra.mxu0 0.0
    %1763 = vmatprep.subr.mxu0 0.0
    %1764 = vmatpush1.msra.mxu0 0.0
    %1765 = vmatprep.subr.mxu0 0.0
    %1766 = vmatpush1.msra.mxu0 0.0
    %1767 = vmatprep.subr.mxu0 0.0
    %1768 = vmatpush1.msra.mxu0 0.0
    %1769 = vmatprep.subr.mxu0 0.0
    %1770 = vmatpush1.msra.mxu0 0.0
    %1771 = vmatprep.subr.mxu0 0.0
    %1772 = vmatpush1.msra.mxu0 0.0
    %1773 = vmatprep.subr.mxu0 0.0
    %1774 = vmatpush1.msra.mxu0 0.0
    %1775 = vmatprep.mubr.f32.mxu0 0.0
    %v1776 = vand.u32 %v1694, 4294901760
    %v1777 = vsub.f32 %v1694, %v1776
    %v1778 = vand.u32 %v1777, 4294901760
    %v1779 = vsub.f32 %v1777, %v1778
    %v1780 = vand.u32 %v1779, 4294901760
    %1781 = vmatmul.mubr.f32.gmra.mrb[0].mxu0 %v1780
    %v1782 = vpop.f32.mrb[0].mxu0
    %v1783 = vadd.f32 0.0, %v1782
    %v1784 = vpop.f32.mrb[0].mxu0
    %1785 = vdwg.mxu0
    %1786 = vmatprep.subr.mxu0 0.0
    %v1787 = vand.u32 %v1035, 4294901760
    %v1788 = vsub.f32 %v1035, %v1787
    %v1789 = vand.u32 %v1788, 4294901760
    %v1790 = vsub.f32 %v1788, %v1789
    %v1791 = vand.u32 %v1790, 4294901760
    %1792 = vmatpush1.msra.mxu0 %v1791
    %1793 = vmatprep.subr.mxu0 0.0
    %v1794 = vand.u32 %v1036, 4294901760
    %v1795 = vsub.f32 %v1036, %v1794
    %v1796 = vand.u32 %v1795, 4294901760
    %v1797 = vsub.f32 %v1795, %v1796
    %v1798 = vand.u32 %v1797, 4294901760
    %1799 = vmatpush1.msra.mxu0 %v1798
    %1800 = vmatprep.subr.mxu0 0.0
    %v1801 = vand.u32 %v1037, 4294901760
    %v1802 = vsub.f32 %v1037, %v1801
    %v1803 = vand.u32 %v1802, 4294901760
    %v1804 = vsub.f32 %v1802, %v1803
    %v1805 = vand.u32 %v1804, 4294901760
    %1806 = vmatpush1.msra.mxu0 %v1805
    %1807 = vmatprep.subr.mxu0 0.0
    %v1808 = vand.u32 %v1038, 4294901760
    %v1809 = vsub.f32 %v1038, %v1808
    %v1810 = vand.u32 %v1809, 4294901760
    %v1811 = vsub.f32 %v1809, %v1810
    %v1812 = vand.u32 %v1811, 4294901760
    %1813 = vmatpush1.msra.mxu0 %v1812
    %1814 = vmatprep.subr.mxu0 0.0
    %v1815 = vand.u32 %v1039, 4294901760
    %v1816 = vsub.f32 %v1039, %v1815
    %v1817 = vand.u32 %v1816, 4294901760
    %v1818 = vsub.f32 %v1816, %v1817
    %v1819 = vand.u32 %v1818, 4294901760
    %1820 = vmatpush1.msra.mxu0 %v1819
    %1821 = vmatprep.subr.mxu0 0.0
    %v1822 = vand.u32 %v1040, 4294901760
    %v1823 = vsub.f32 %v1040, %v1822
    %v1824 = vand.u32 %v1823, 4294901760
    %v1825 = vsub.f32 %v1823, %v1824
    %v1826 = vand.u32 %v1825, 4294901760
    %1827 = vmatpush1.msra.mxu0 %v1826
    %1828 = vmatprep.subr.mxu0 0.0
    %v1829 = vand.u32 %v1041, 4294901760
    %v1830 = vsub.f32 %v1041, %v1829
    %v1831 = vand.u32 %v1830, 4294901760
    %v1832 = vsub.f32 %v1830, %v1831
    %v1833 = vand.u32 %v1832, 4294901760
    %1834 = vmatpush1.msra.mxu0 %v1833
    %1835 = vmatprep.subr.mxu0 0.0
    %v1836 = vand.u32 %v1042, 4294901760
    %v1837 = vsub.f32 %v1042, %v1836
    %v1838 = vand.u32 %v1837, 4294901760
    %v1839 = vsub.f32 %v1837, %v1838
    %v1840 = vand.u32 %v1839, 4294901760
    %1841 = vmatpush1.msra.mxu0 %v1840
    %1842 = vmatprep.subr.mxu0 0.0
    %v1843 = vand.u32 %v1043, 4294901760
    %v1844 = vsub.f32 %v1043, %v1843
    %v1845 = vand.u32 %v1844, 4294901760
    %v1846 = vsub.f32 %v1844, %v1845
    %v1847 = vand.u32 %v1846, 4294901760
    %1848 = vmatpush1.msra.mxu0 %v1847
    %1849 = vmatprep.subr.mxu0 0.0
    %v1850 = vand.u32 %v1044, 4294901760
    %v1851 = vsub.f32 %v1044, %v1850
    %v1852 = vand.u32 %v1851, 4294901760
    %v1853 = vsub.f32 %v1851, %v1852
    %v1854 = vand.u32 %v1853, 4294901760
    %1855 = vmatpush1.msra.mxu0 %v1854
    %1856 = vmatprep.subr.mxu0 0.0
    %v1857 = vand.u32 %v1045, 4294901760
    %v1858 = vsub.f32 %v1045, %v1857
    %v1859 = vand.u32 %v1858, 4294901760
    %v1860 = vsub.f32 %v1858, %v1859
    %v1861 = vand.u32 %v1860, 4294901760
    %1862 = vmatpush1.msra.mxu0 %v1861
    %1863 = vmatprep.subr.mxu0 0.0
    %v1864 = vand.u32 %v1046, 4294901760
    %v1865 = vsub.f32 %v1046, %v1864
    %v1866 = vand.u32 %v1865, 4294901760
    %v1867 = vsub.f32 %v1865, %v1866
    %v1868 = vand.u32 %v1867, 4294901760
    %1869 = vmatpush1.msra.mxu0 %v1868
    %1870 = vmatprep.subr.mxu0 0.0
    %v1871 = vand.u32 %v1047, 4294901760
    %v1872 = vsub.f32 %v1047, %v1871
    %v1873 = vand.u32 %v1872, 4294901760
    %v1874 = vsub.f32 %v1872, %v1873
    %v1875 = vand.u32 %v1874, 4294901760
    %1876 = vmatpush1.msra.mxu0 %v1875
    %1877 = vmatprep.subr.mxu0 0.0
    %v1878 = vand.u32 %v1048, 4294901760
    %v1879 = vsub.f32 %v1048, %v1878
    %v1880 = vand.u32 %v1879, 4294901760
    %v1881 = vsub.f32 %v1879, %v1880
    %v1882 = vand.u32 %v1881, 4294901760
    %1883 = vmatpush1.msra.mxu0 %v1882
    %1884 = vmatprep.subr.mxu0 0.0
    %v1885 = vand.u32 %v1049, 4294901760
    %v1886 = vsub.f32 %v1049, %v1885
    %v1887 = vand.u32 %v1886, 4294901760
    %v1888 = vsub.f32 %v1886, %v1887
    %v1889 = vand.u32 %v1888, 4294901760
    %1890 = vmatpush1.msra.mxu0 %v1889
    %1891 = vmatprep.subr.mxu0 0.0
    %v1892 = vand.u32 %v1050, 4294901760
    %v1893 = vsub.f32 %v1050, %v1892
    %v1894 = vand.u32 %v1893, 4294901760
    %v1895 = vsub.f32 %v1893, %v1894
    %v1896 = vand.u32 %v1895, 4294901760
    %1897 = vmatpush1.msra.mxu0 %v1896
    %1898 = vmatprep.subr.mxu0 0.0
    %1899 = vmatpush1.msra.mxu0 0.0
    %1900 = vmatprep.subr.mxu0 0.0
    %1901 = vmatpush1.msra.mxu0 0.0
    %1902 = vmatprep.subr.mxu0 0.0
    %1903 = vmatpush1.msra.mxu0 0.0
    %1904 = vmatprep.subr.mxu0 0.0
    %1905 = vmatpush1.msra.mxu0 0.0
    %1906 = vmatprep.subr.mxu0 0.0
    %1907 = vmatpush1.msra.mxu0 0.0
    %1908 = vmatprep.subr.mxu0 0.0
    %1909 = vmatpush1.msra.mxu0 0.0
    %1910 = vmatprep.subr.mxu0 0.0
    %1911 = vmatpush1.msra.mxu0 0.0
    %1912 = vmatprep.subr.mxu0 0.0
    %1913 = vmatpush1.msra.mxu0 0.0
    %1914 = vmatprep.subr.mxu0 0.0
    %1915 = vmatpush1.msra.mxu0 0.0
    %1916 = vmatprep.subr.mxu0 0.0
    %1917 = vmatpush1.msra.mxu0 0.0
    %1918 = vmatprep.subr.mxu0 0.0
    %1919 = vmatpush1.msra.mxu0 0.0
    %1920 = vmatprep.subr.mxu0 0.0
    %1921 = vmatpush1.msra.mxu0 0.0
    %1922 = vmatprep.subr.mxu0 0.0
    %1923 = vmatpush1.msra.mxu0 0.0
    %1924 = vmatprep.subr.mxu0 0.0
    %1925 = vmatpush1.msra.mxu0 0.0
    %1926 = vmatprep.subr.mxu0 0.0
    %1927 = vmatpush1.msra.mxu0 0.0
    %1928 = vmatprep.subr.mxu0 0.0
    %1929 = vmatpush1.msra.mxu0 0.0
    %1930 = vmatprep.mubr.f32.mxu0 0.0
    %v1931 = vand.u32 %v1694, 4294901760
    %1932 = vmatmul.mubr.f32.gmra.mrb[0].mxu0 %v1931
    %v1933 = vpop.f32.mrb[0].mxu0
    %v1934 = vadd.f32 %v1783, %v1933
    %v1935 = vpop.f32.mrb[0].mxu0
    %1936 = vdwg.mxu0
    %1937 = vmatprep.subr.mxu0 0.0
    %v1938 = vand.u32 %v1035, 4294901760
    %v1939 = vsub.f32 %v1035, %v1938
    %1940 = vmatpush1.msra.mxu0 %v1939
    %1941 = vmatprep.subr.mxu0 0.0
    %v1942 = vand.u32 %v1036, 4294901760
    %v1943 = vsub.f32 %v1036, %v1942
    %1944 = vmatpush1.msra.mxu0 %v1943
    %1945 = vmatprep.subr.mxu0 0.0
    %v1946 = vand.u32 %v1037, 4294901760
    %v1947 = vsub.f32 %v1037, %v1946
    %1948 = vmatpush1.msra.mxu0 %v1947
    %1949 = vmatprep.subr.mxu0 0.0
    %v1950 = vand.u32 %v1038, 4294901760
    %v1951 = vsub.f32 %v1038, %v1950
    %1952 = vmatpush1.msra.mxu0 %v1951
    %1953 = vmatprep.subr.mxu0 0.0
    %v1954 = vand.u32 %v1039, 4294901760
    %v1955 = vsub.f32 %v1039, %v1954
    %1956 = vmatpush1.msra.mxu0 %v1955
    %1957 = vmatprep.subr.mxu0 0.0
    %v1958 = vand.u32 %v1040, 4294901760
    %v1959 = vsub.f32 %v1040, %v1958
    %1960 = vmatpush1.msra.mxu0 %v1959
    %1961 = vmatprep.subr.mxu0 0.0
    %v1962 = vand.u32 %v1041, 4294901760
    %v1963 = vsub.f32 %v1041, %v1962
    %1964 = vmatpush1.msra.mxu0 %v1963
    %1965 = vmatprep.subr.mxu0 0.0
    %v1966 = vand.u32 %v1042, 4294901760
    %v1967 = vsub.f32 %v1042, %v1966
    %1968 = vmatpush1.msra.mxu0 %v1967
    %1969 = vmatprep.subr.mxu0 0.0
    %v1970 = vand.u32 %v1043, 4294901760
    %v1971 = vsub.f32 %v1043, %v1970
    %1972 = vmatpush1.msra.mxu0 %v1971
    %1973 = vmatprep.subr.mxu0 0.0
    %v1974 = vand.u32 %v1044, 4294901760
    %v1975 = vsub.f32 %v1044, %v1974
    %1976 = vmatpush1.msra.mxu0 %v1975
    %1977 = vmatprep.subr.mxu0 0.0
    %v1978 = vand.u32 %v1045, 4294901760
    %v1979 = vsub.f32 %v1045, %v1978
    %1980 = vmatpush1.msra.mxu0 %v1979
    %1981 = vmatprep.subr.mxu0 0.0
    %v1982 = vand.u32 %v1046, 4294901760
    %v1983 = vsub.f32 %v1046, %v1982
    %1984 = vmatpush1.msra.mxu0 %v1983
    %1985 = vmatprep.subr.mxu0 0.0
    %v1986 = vand.u32 %v1047, 4294901760
    %v1987 = vsub.f32 %v1047, %v1986
    %1988 = vmatpush1.msra.mxu0 %v1987
    %1989 = vmatprep.subr.mxu0 0.0
    %v1990 = vand.u32 %v1048, 4294901760
    %v1991 = vsub.f32 %v1048, %v1990
    %1992 = vmatpush1.msra.mxu0 %v1991
    %1993 = vmatprep.subr.mxu0 0.0
    %v1994 = vand.u32 %v1049, 4294901760
    %v1995 = vsub.f32 %v1049, %v1994
    %1996 = vmatpush1.msra.mxu0 %v1995
    %1997 = vmatprep.subr.mxu0 0.0
    %v1998 = vand.u32 %v1050, 4294901760
    %v1999 = vsub.f32 %v1050, %v1998
    %2000 = vmatpush1.msra.mxu0 %v1999
    %2001 = vmatprep.subr.mxu0 0.0
    %2002 = vmatpush1.msra.mxu0 0.0
    %2003 = vmatprep.subr.mxu0 0.0
    %2004 = vmatpush1.msra.mxu0 0.0
    %2005 = vmatprep.subr.mxu0 0.0
    %2006 = vmatpush1.msra.mxu0 0.0
    %2007 = vmatprep.subr.mxu0 0.0
    %2008 = vmatpush1.msra.mxu0 0.0
    %2009 = vmatprep.subr.mxu0 0.0
    %2010 = vmatpush1.msra.mxu0 0.0
    %2011 = vmatprep.subr.mxu0 0.0
    %2012 = vmatpush1.msra.mxu0 0.0
    %2013 = vmatprep.subr.mxu0 0.0
    %2014 = vmatpush1.msra.mxu0 0.0
    %2015 = vmatprep.subr.mxu0 0.0
    %2016 = vmatpush1.msra.mxu0 0.0
    %2017 = vmatprep.subr.mxu0 0.0
    %2018 = vmatpush1.msra.mxu0 0.0
    %2019 = vmatprep.subr.mxu0 0.0
    %2020 = vmatpush1.msra.mxu0 0.0
    %2021 = vmatprep.subr.mxu0 0.0
    %2022 = vmatpush1.msra.mxu0 0.0
    %2023 = vmatprep.subr.mxu0 0.0
    %2024 = vmatpush1.msra.mxu0 0.0
    %2025 = vmatprep.subr.mxu0 0.0
    %2026 = vmatpush1.msra.mxu0 0.0
    %2027 = vmatprep.subr.mxu0 0.0
    %2028 = vmatpush1.msra.mxu0 0.0
    %2029 = vmatprep.subr.mxu0 0.0
    %2030 = vmatpush1.msra.mxu0 0.0
    %2031 = vmatprep.subr.mxu0 0.0
    %2032 = vmatpush1.msra.mxu0 0.0
    %2033 = vmatprep.mubr.f32.mxu0 0.0
    %v2034 = vand.u32 %v1694, 4294901760
    %v2035 = vsub.f32 %v1694, %v2034
    %2036 = vmatmul.mubr.f32.gmra.mrb[0].mxu0 %v2035
    %v2037 = vpop.f32.mrb[0].mxu0
    %v2038 = vadd.f32 %v1934, %v2037
    %v2039 = vpop.f32.mrb[0].mxu0
    %2040 = vdwg.mxu0
    %2041 = vmatprep.subr.mxu0 0.0
    %v2042 = vand.u32 %v1035, 4294901760
    %2043 = vmatpush1.msra.mxu0 %v2042
    %2044 = vmatprep.subr.mxu0 0.0
    %v2045 = vand.u32 %v1036, 4294901760
    %2046 = vmatpush1.msra.mxu0 %v2045
    %2047 = vmatprep.subr.mxu0 0.0
    %v2048 = vand.u32 %v1037, 4294901760
    %2049 = vmatpush1.msra.mxu0 %v2048
    %2050 = vmatprep.subr.mxu0 0.0
    %v2051 = vand.u32 %v1038, 4294901760
    %2052 = vmatpush1.msra.mxu0 %v2051
    %2053 = vmatprep.subr.mxu0 0.0
    %v2054 = vand.u32 %v1039, 4294901760
    %2055 = vmatpush1.msra.mxu0 %v2054
    %2056 = vmatprep.subr.mxu0 0.0
    %v2057 = vand.u32 %v1040, 4294901760
    %2058 = vmatpush1.msra.mxu0 %v2057
    %2059 = vmatprep.subr.mxu0 0.0
    %v2060 = vand.u32 %v1041, 4294901760
    %2061 = vmatpush1.msra.mxu0 %v2060
    %2062 = vmatprep.subr.mxu0 0.0
    %v2063 = vand.u32 %v1042, 4294901760
    %2064 = vmatpush1.msra.mxu0 %v2063
    %2065 = vmatprep.subr.mxu0 0.0
    %v2066 = vand.u32 %v1043, 4294901760
    %2067 = vmatpush1.msra.mxu0 %v2066
    %2068 = vmatprep.subr.mxu0 0.0
    %v2069 = vand.u32 %v1044, 4294901760
    %2070 = vmatpush1.msra.mxu0 %v2069
    %2071 = vmatprep.subr.mxu0 0.0
    %v2072 = vand.u32 %v1045, 4294901760
    %2073 = vmatpush1.msra.mxu0 %v2072
    %2074 = vmatprep.subr.mxu0 0.0
    %v2075 = vand.u32 %v1046, 4294901760
    %2076 = vmatpush1.msra.mxu0 %v2075
    %2077 = vmatprep.subr.mxu0 0.0
    %v2078 = vand.u32 %v1047, 4294901760
    %2079 = vmatpush1.msra.mxu0 %v2078
    %2080 = vmatprep.subr.mxu0 0.0
    %v2081 = vand.u32 %v1048, 4294901760
    %2082 = vmatpush1.msra.mxu0 %v2081
    %2083 = vmatprep.subr.mxu0 0.0
    %v2084 = vand.u32 %v1049, 4294901760
    %2085 = vmatpush1.msra.mxu0 %v2084
    %2086 = vmatprep.subr.mxu0 0.0
    %v2087 = vand.u32 %v1050, 4294901760
    %2088 = vmatpush1.msra.mxu0 %v2087
    %2089 = vmatprep.subr.mxu0 0.0
    %2090 = vmatpush1.msra.mxu0 0.0
    %2091 = vmatprep.subr.mxu0 0.0
    %2092 = vmatpush1.msra.mxu0 0.0
    %2093 = vmatprep.subr.mxu0 0.0
    %2094 = vmatpush1.msra.mxu0 0.0
    %2095 = vmatprep.subr.mxu0 0.0
    %2096 = vmatpush1.msra.mxu0 0.0
    %2097 = vmatprep.subr.mxu0 0.0
    %2098 = vmatpush1.msra.mxu0 0.0
    %2099 = vmatprep.subr.mxu0 0.0
    %2100 = vmatpush1.msra.mxu0 0.0
    %2101 = vmatprep.subr.mxu0 0.0
    %2102 = vmatpush1.msra.mxu0 0.0
    %2103 = vmatprep.subr.mxu0 0.0
    %2104 = vmatpush1.msra.mxu0 0.0
    %2105 = vmatprep.subr.mxu0 0.0
    %2106 = vmatpush1.msra.mxu0 0.0
    %2107 = vmatprep.subr.mxu0 0.0
    %2108 = vmatpush1.msra.mxu0 0.0
    %2109 = vmatprep.subr.mxu0 0.0
    %2110 = vmatpush1.msra.mxu0 0.0
    %2111 = vmatprep.subr.mxu0 0.0
    %2112 = vmatpush1.msra.mxu0 0.0
    %2113 = vmatprep.subr.mxu0 0.0
    %2114 = vmatpush1.msra.mxu0 0.0
    %2115 = vmatprep.subr.mxu0 0.0
    %2116 = vmatpush1.msra.mxu0 0.0
    %2117 = vmatprep.subr.mxu0 0.0
    %2118 = vmatpush1.msra.mxu0 0.0
    %2119 = vmatprep.subr.mxu0 0.0
    %2120 = vmatpush1.msra.mxu0 0.0
    %2121 = vmatprep.mubr.f32.mxu0 0.0
    %v2122 = vand.u32 %v1694, 4294901760
    %v2123 = vsub.f32 %v1694, %v2122
    %v2124 = vand.u32 %v2123, 4294901760
    %2125 = vmatmul.mubr.f32.gmra.mrb[0].mxu0 %v2124
    %v2126 = vpop.f32.mrb[0].mxu0
    %v2127 = vadd.f32 %v2038, %v2126
    %v2128 = vpop.f32.mrb[0].mxu0
    %2129 = vdwg.mxu0
    %2130 = vmatprep.subr.mxu0 0.0
    %v2131 = vand.u32 %v1035, 4294901760
    %v2132 = vsub.f32 %v1035, %v2131
    %v2133 = vand.u32 %v2132, 4294901760
    %2134 = vmatpush1.msra.mxu0 %v2133
    %2135 = vmatprep.subr.mxu0 0.0
    %v2136 = vand.u32 %v1036, 4294901760
    %v2137 = vsub.f32 %v1036, %v2136
    %v2138 = vand.u32 %v2137, 4294901760
    %2139 = vmatpush1.msra.mxu0 %v2138
    %2140 = vmatprep.subr.mxu0 0.0
    %v2141 = vand.u32 %v1037, 4294901760
    %v2142 = vsub.f32 %v1037, %v2141
    %v2143 = vand.u32 %v2142, 4294901760
    %2144 = vmatpush1.msra.mxu0 %v2143
    %2145 = vmatprep.subr.mxu0 0.0
    %v2146 = vand.u32 %v1038, 4294901760
    %v2147 = vsub.f32 %v1038, %v2146
    %v2148 = vand.u32 %v2147, 4294901760
    %2149 = vmatpush1.msra.mxu0 %v2148
    %2150 = vmatprep.subr.mxu0 0.0
    %v2151 = vand.u32 %v1039, 4294901760
    %v2152 = vsub.f32 %v1039, %v2151
    %v2153 = vand.u32 %v2152, 4294901760
    %2154 = vmatpush1.msra.mxu0 %v2153
    %2155 = vmatprep.subr.mxu0 0.0
    %v2156 = vand.u32 %v1040, 4294901760
    %v2157 = vsub.f32 %v1040, %v2156
    %v2158 = vand.u32 %v2157, 4294901760
    %2159 = vmatpush1.msra.mxu0 %v2158
    %2160 = vmatprep.subr.mxu0 0.0
    %v2161 = vand.u32 %v1041, 4294901760
    %v2162 = vsub.f32 %v1041, %v2161
    %v2163 = vand.u32 %v2162, 4294901760
    %2164 = vmatpush1.msra.mxu0 %v2163
    %2165 = vmatprep.subr.mxu0 0.0
    %v2166 = vand.u32 %v1042, 4294901760
    %v2167 = vsub.f32 %v1042, %v2166
    %v2168 = vand.u32 %v2167, 4294901760
    %2169 = vmatpush1.msra.mxu0 %v2168
    %2170 = vmatprep.subr.mxu0 0.0
    %v2171 = vand.u32 %v1043, 4294901760
    %v2172 = vsub.f32 %v1043, %v2171
    %v2173 = vand.u32 %v2172, 4294901760
    %2174 = vmatpush1.msra.mxu0 %v2173
    %2175 = vmatprep.subr.mxu0 0.0
    %v2176 = vand.u32 %v1044, 4294901760
    %v2177 = vsub.f32 %v1044, %v2176
    %v2178 = vand.u32 %v2177, 4294901760
    %2179 = vmatpush1.msra.mxu0 %v2178
    %2180 = vmatprep.subr.mxu0 0.0
    %v2181 = vand.u32 %v1045, 4294901760
    %v2182 = vsub.f32 %v1045, %v2181
    %v2183 = vand.u32 %v2182, 4294901760
    %2184 = vmatpush1.msra.mxu0 %v2183
    %2185 = vmatprep.subr.mxu0 0.0
    %v2186 = vand.u32 %v1046, 4294901760
    %v2187 = vsub.f32 %v1046, %v2186
    %v2188 = vand.u32 %v2187, 4294901760
    %2189 = vmatpush1.msra.mxu0 %v2188
    %2190 = vmatprep.subr.mxu0 0.0
    %v2191 = vand.u32 %v1047, 4294901760
    %v2192 = vsub.f32 %v1047, %v2191
    %v2193 = vand.u32 %v2192, 4294901760
    %2194 = vmatpush1.msra.mxu0 %v2193
    %2195 = vmatprep.subr.mxu0 0.0
    %v2196 = vand.u32 %v1048, 4294901760
    %v2197 = vsub.f32 %v1048, %v2196
    %v2198 = vand.u32 %v2197, 4294901760
    %2199 = vmatpush1.msra.mxu0 %v2198
    %2200 = vmatprep.subr.mxu0 0.0
    %v2201 = vand.u32 %v1049, 4294901760
    %v2202 = vsub.f32 %v1049, %v2201
    %v2203 = vand.u32 %v2202, 4294901760
    %2204 = vmatpush1.msra.mxu0 %v2203
    %2205 = vmatprep.subr.mxu0 0.0
    %v2206 = vand.u32 %v1050, 4294901760
    %v2207 = vsub.f32 %v1050, %v2206
    %v2208 = vand.u32 %v2207, 4294901760
    %2209 = vmatpush1.msra.mxu0 %v2208
    %2210 = vmatprep.subr.mxu0 0.0
    %2211 = vmatpush1.msra.mxu0 0.0
    %2212 = vmatprep.subr.mxu0 0.0
    %2213 = vmatpush1.msra.mxu0 0.0
    %2214 = vmatprep.subr.mxu0 0.0
    %2215 = vmatpush1.msra.mxu0 0.0
    %2216 = vmatprep.subr.mxu0 0.0
    %2217 = vmatpush1.msra.mxu0 0.0
    %2218 = vmatprep.subr.mxu0 0.0
    %2219 = vmatpush1.msra.mxu0 0.0
    %2220 = vmatprep.subr.mxu0 0.0
    %2221 = vmatpush1.msra.mxu0 0.0
    %2222 = vmatprep.subr.mxu0 0.0
    %2223 = vmatpush1.msra.mxu0 0.0
    %2224 = vmatprep.subr.mxu0 0.0
    %2225 = vmatpush1.msra.mxu0 0.0
    %2226 = vmatprep.subr.mxu0 0.0
    %2227 = vmatpush1.msra.mxu0 0.0
    %2228 = vmatprep.subr.mxu0 0.0
    %2229 = vmatpush1.msra.mxu0 0.0
    %2230 = vmatprep.subr.mxu0 0.0
    %2231 = vmatpush1.msra.mxu0 0.0
    %2232 = vmatprep.subr.mxu0 0.0
    %2233 = vmatpush1.msra.mxu0 0.0
    %2234 = vmatprep.subr.mxu0 0.0
    %2235 = vmatpush1.msra.mxu0 0.0
    %2236 = vmatprep.subr.mxu0 0.0
    %2237 = vmatpush1.msra.mxu0 0.0
    %2238 = vmatprep.subr.mxu0 0.0
    %2239 = vmatpush1.msra.mxu0 0.0
    %2240 = vmatprep.subr.mxu0 0.0
    %2241 = vmatpush1.msra.mxu0 0.0
    %2242 = vmatprep.mubr.f32.mxu0 0.0
    %v2243 = vand.u32 %v1694, 4294901760
    %2244 = vmatmul.mubr.f32.gmra.mrb[0].mxu0 %v2243
    %v2245 = vpop.f32.mrb[0].mxu0
    %v2246 = vadd.f32 %v2127, %v2245
    %v2247 = vpop.f32.mrb[0].mxu0
    %2248 = vdwg.mxu0
    %2249 = vmatprep.subr.mxu0 0.0
    %v2250 = vand.u32 %v1035, 4294901760
    %2251 = vmatpush1.msra.mxu0 %v2250
    %2252 = vmatprep.subr.mxu0 0.0
    %v2253 = vand.u32 %v1036, 4294901760
    %2254 = vmatpush1.msra.mxu0 %v2253
    %2255 = vmatprep.subr.mxu0 0.0
    %v2256 = vand.u32 %v1037, 4294901760
    %2257 = vmatpush1.msra.mxu0 %v2256
    %2258 = vmatprep.subr.mxu0 0.0
    %v2259 = vand.u32 %v1038, 4294901760
    %2260 = vmatpush1.msra.mxu0 %v2259
    %2261 = vmatprep.subr.mxu0 0.0
    %v2262 = vand.u32 %v1039, 4294901760
    %2263 = vmatpush1.msra.mxu0 %v2262
    %2264 = vmatprep.subr.mxu0 0.0
    %v2265 = vand.u32 %v1040, 4294901760
    %2266 = vmatpush1.msra.mxu0 %v2265
    %2267 = vmatprep.subr.mxu0 0.0
    %v2268 = vand.u32 %v1041, 4294901760
    %2269 = vmatpush1.msra.mxu0 %v2268
    %2270 = vmatprep.subr.mxu0 0.0
    %v2271 = vand.u32 %v1042, 4294901760
    %2272 = vmatpush1.msra.mxu0 %v2271
    %2273 = vmatprep.subr.mxu0 0.0
    %v2274 = vand.u32 %v1043, 4294901760
    %2275 = vmatpush1.msra.mxu0 %v2274
    %2276 = vmatprep.subr.mxu0 0.0
    %v2277 = vand.u32 %v1044, 4294901760
    %2278 = vmatpush1.msra.mxu0 %v2277
    %2279 = vmatprep.subr.mxu0 0.0
    %v2280 = vand.u32 %v1045, 4294901760
    %2281 = vmatpush1.msra.mxu0 %v2280
    %2282 = vmatprep.subr.mxu0 0.0
    %v2283 = vand.u32 %v1046, 4294901760
    %2284 = vmatpush1.msra.mxu0 %v2283
    %2285 = vmatprep.subr.mxu0 0.0
    %v2286 = vand.u32 %v1047, 4294901760
    %2287 = vmatpush1.msra.mxu0 %v2286
    %2288 = vmatprep.subr.mxu0 0.0
    %v2289 = vand.u32 %v1048, 4294901760
    %2290 = vmatpush1.msra.mxu0 %v2289
    %2291 = vmatprep.subr.mxu0 0.0
    %v2292 = vand.u32 %v1049, 4294901760
    %2293 = vmatpush1.msra.mxu0 %v2292
    %2294 = vmatprep.subr.mxu0 0.0
    %v2295 = vand.u32 %v1050, 4294901760
    %2296 = vmatpush1.msra.mxu0 %v2295
    %2297 = vmatprep.subr.mxu0 0.0
    %2298 = vmatpush1.msra.mxu0 0.0
    %2299 = vmatprep.subr.mxu0 0.0
    %2300 = vmatpush1.msra.mxu0 0.0
    %2301 = vmatprep.subr.mxu0 0.0
    %2302 = vmatpush1.msra.mxu0 0.0
    %2303 = vmatprep.subr.mxu0 0.0
    %2304 = vmatpush1.msra.mxu0 0.0
    %2305 = vmatprep.subr.mxu0 0.0
    %2306 = vmatpush1.msra.mxu0 0.0
    %2307 = vmatprep.subr.mxu0 0.0
    %2308 = vmatpush1.msra.mxu0 0.0
    %2309 = vmatprep.subr.mxu0 0.0
    %2310 = vmatpush1.msra.mxu0 0.0
    %2311 = vmatprep.subr.mxu0 0.0
    %2312 = vmatpush1.msra.mxu0 0.0
    %2313 = vmatprep.subr.mxu0 0.0
    %2314 = vmatpush1.msra.mxu0 0.0
    %2315 = vmatprep.subr.mxu0 0.0
    %2316 = vmatpush1.msra.mxu0 0.0
    %2317 = vmatprep.subr.mxu0 0.0
    %2318 = vmatpush1.msra.mxu0 0.0
    %2319 = vmatprep.subr.mxu0 0.0
    %2320 = vmatpush1.msra.mxu0 0.0
    %2321 = vmatprep.subr.mxu0 0.0
    %2322 = vmatpush1.msra.mxu0 0.0
    %2323 = vmatprep.subr.mxu0 0.0
    %2324 = vmatpush1.msra.mxu0 0.0
    %2325 = vmatprep.subr.mxu0 0.0
    %2326 = vmatpush1.msra.mxu0 0.0
    %2327 = vmatprep.subr.mxu0 0.0
    %2328 = vmatpush1.msra.mxu0 0.0
    %2329 = vmatprep.mubr.f32.mxu0 0.0
    %v2330 = vand.u32 %v1694, 4294901760
    %2331 = vmatmul.mubr.f32.gmra.mrb[0].mxu0 %v2330
    %v2332 = vpop.f32.mrb[0].mxu0
    %v2333 = vadd.f32 %v2246, %v2332
    %v2334 = vpop.f32.mrb[0].mxu0
    %2335 = vdwg.mxu0
    %v2336 = vmul.f32 %v2333, 0.03125
    %v2337 = vadd.f32 %v2336, 1e-05
    %v2338 = vrsqrt.pop %v2337
    %v2339 = vmul.f32 %v1693, %v2338
    %v2340 = vld [vmem:[%s2] sm:$0x1]
    %v2341 = vlaneseq
    %v2342 = vshrl.u32 %v2341, 7
    %v2343 = vsub.s32 0, %v2342
    %v2344 = vrot.slane %v2340, %v2343
    %v2345 = vmul.f32 %v2339, %v2344
    %v2346 = vld [vmem:[%s2 + $0x1] sm:$0x1]
    %v2347 = vlaneseq
    %v2348 = vshrl.u32 %v2347, 7
    %v2349 = vsub.s32 0, %v2348
    %v2350 = vrot.slane %v2346, %v2349
    %v2351 = vadd.f32 %v2345, %v2350
    %2352 = vst [vmem:[#allocation5] sm:$0xff] %v2351
    // Predicated region
    $region18: #{tpu_custom_call.1} parent=1 // pred_check
      _
    $region19: #{tpu_custom_call.1} parent=1 // pred_check_branch
      %2354 = sbr.rel (0) target = $region21
    $region20: #{tpu_custom_call.1} parent=1 // pred_region
      %s2356 = ssub.s32 128, 128
      %2357 = vsyncadd [#allocation4], %s2356
      %s2359 = sshll.u32 [#allocation5], 4
      %s2360 = int_to_ptr.vmem [resolvable:$true] %s2359
      %2362 = dma.vmem_to_hbm [thread:$0]  %s2360, 128, %s3, [#allocation4]
    $region21: #{tpu_custom_call.1} parent=1 // pred_fallthru
      _
    // Predicated region
    $region22: #{tpu_custom_call.1} parent=1 // pred_check
      _
    $region23: #{tpu_custom_call.1} parent=1 // pred_check_branch
      %2364 = sbr.rel (0) target = $region25
    $region24: #{tpu_custom_call.1} parent=1 // pred_region
      %2365 = dma.done [#allocation4], 128
    $region25: #{tpu_custom_call.1} parent=1 // pred_fallthru
      _
    %2366 = vsyncpa [#allocation3], 1
    %2367 = vsyncpa [#allocation4], 1

</llo_original>
